<compile_context>
chip_gen: v5e
topology: v5e:2x2
jax: 0.10.0
libtpu: 0.0.40
codegen_flags: <defaults>
</compile_context>

<pallas_src>
import jax
import jax.numpy as jnp
from jax.experimental import pallas as pl
from jax.experimental.pallas import tpu as pltpu


def _round_up(n, m):
    return ((n + m - 1) // m) * m


# ----------------------------------------------------------------------------
# Fused Pallas kernel: whole encoder+decoder for one batch tile.
# ----------------------------------------------------------------------------
def _cae_fused_kernel(x_ref, c_ref,
                      w1_ref, b1_ref, w2_ref, b2_ref, w3_ref, b3_ref,
                      w4_ref, b4_ref, w5z_ref, w5c_ref, b5_ref,
                      w6_ref, b6_ref, w7_ref, b7_ref, w8_ref, b8_ref,
                      o_ref):
    def dense(h, w_ref, b_ref):
        # bf16 x bf16 -> f32 accumulation on the MXU; f32 epilogue.
        return jnp.dot(h.astype(w_ref.dtype), w_ref[...],
                       preferred_element_type=jnp.float32) + b_ref[...]

    def relu(t):
        return jnp.maximum(t, 0.0)

    # ---- encoder ----
    x = x_ref[...]                                    # (TB, 64)  f32
    h = relu(dense(x, w1_ref, b1_ref))                # conv1   -> (TB, 512)
    h = relu(dense(h, w2_ref, b2_ref))                # conv2   -> (TB, 256)
    h = relu(dense(h, w3_ref, b3_ref))                # fc1     -> (TB, 64)
    z = dense(h, w4_ref, b4_ref)                      # fc2     -> (TB, 16)

    # ---- conditioning: concat(z, c) @ W5  ==  z @ W5z + c * w5c ----
    c = c_ref[...]                                    # (TB, 1)   f32
    h = jnp.dot(z.astype(w5z_ref.dtype), w5z_ref[...],
                preferred_element_type=jnp.float32)
    h = relu(h + c * w5c_ref[...] + b5_ref[...])      # dec fc1 -> (TB, 64)

    # ---- decoder ----
    h = relu(dense(h, w6_ref, b6_ref))                # dec fc2  -> (TB, 256)
    h = relu(dense(h, w7_ref, b7_ref))                # deconv   -> (TB, 512)
    logits = dense(h, w8_ref, b8_ref)                 # conv_out -> (TB, 64)

    # numerically-stable sigmoid: exp + reciprocal both on the EUP slot.
    e = jnp.exp(-jnp.abs(logits))                     # exp(-|x|) in (0, 1]
    inv = pl.reciprocal(1.0 + e, approx=True)
    o_ref[...] = jnp.where(logits >= 0.0, inv, e * inv).astype(o_ref.dtype)


# ----------------------------------------------------------------------------
# One-time parameter preparation: fold the fixed spatial structure of every
# conv / conv-transpose into a dense (K, N) weight matrix (trace-time only;
# all per-sample MACs run inside the Pallas kernel above).
# ----------------------------------------------------------------------------
def _conv_as_dense(w, b, in_shape, stride, pad):
    # w: (C_out, C_in, kh, kw)  — PyTorch Conv2d layout.
    _, C_in, _, _ = w.shape
    _, H, W = in_shape
    eye = jnp.eye(C_in * H * W, dtype=jnp.float32).reshape(-1, C_in, H, W)
    out = jax.lax.conv_general_dilated(
        eye, w.astype(jnp.float32), (stride, stride),
        [(pad, pad), (pad, pad)],
        dimension_numbers=("NCHW", "OIHW", "NCHW"))
    Co, Ho, Wo = out.shape[1:]
    return out.reshape(C_in * H * W, Co * Ho * Wo), jnp.repeat(b, Ho * Wo)


def _conv_transpose_as_dense(w, b, in_shape, stride, pad, out_pad):
    # w: (C_in, C_out, kh, kw)  — PyTorch ConvTranspose2d layout.
    C_in, _, kh, _ = w.shape
    _, H, W = in_shape
    w_eff = jnp.transpose(jnp.flip(w, axis=(2, 3)), (1, 0, 2, 3))  # OIHW
    eye = jnp.eye(C_in * H * W, dtype=jnp.float32).reshape(-1, C_in, H, W)
    p_lo, p_hi = kh - 1 - pad, kh - 1 - pad + out_pad
    out = jax.lax.conv_general_dilated(
        eye, w_eff.astype(jnp.float32), (1, 1),
        [(p_lo, p_hi), (p_lo, p_hi)],
        lhs_dilation=(stride, stride),
        dimension_numbers=("NCHW", "OIHW", "NCHW"))
    Co, Ho, Wo = out.shape[1:]
    return out.reshape(C_in * H * W, Co * Ho * Wo), jnp.repeat(b, Ho * Wo)


def fold_params(params, latent_dims=16, compute_dtype=jnp.bfloat16):
    w1, b1 = _conv_as_dense(params["enc_conv1_w"], params["enc_conv1_b"], (1, 8, 8), 1, 1)
    w2, b2 = _conv_as_dense(params["enc_conv2_w"], params["enc_conv2_b"], (8, 8, 8), 2, 1)
    w7, b7 = _conv_transpose_as_dense(params["dec_deconv1_w"], params["dec_deconv1_b"],
                                      (16, 4, 4), 2, 1, 1)
    w8, b8 = _conv_as_dense(params["dec_conv_out_w"], params["dec_conv_out_b"], (8, 8, 8), 1, 1)

    w3, b3 = params["enc_fc1_w"].T, params["enc_fc1_b"]          # (256, 64)
    w4, b4 = params["enc_fc2_w"].T, params["enc_fc2_b"]          # (64, 16)
    w5 = params["dec_fc1_w"].T                                   # (17, 64)
    w5z, w5c = w5[:latent_dims], w5[latent_dims:latent_dims + 1]
    b5 = params["dec_fc1_b"]
    w6, b6 = params["dec_fc2_w"].T, params["dec_fc2_b"]          # (64, 256)

    W = lambda w: w.astype(compute_dtype)                        # MXU operands
    Bv = lambda b: b.reshape(1, -1).astype(jnp.float32)          # f32 epilogue
    return {
        "w1": W(w1), "b1": Bv(b1), "w2": W(w2), "b2": Bv(b2),
        "w3": W(w3), "b3": Bv(b3), "w4": W(w4), "b4": Bv(b4),
        "w5z": W(w5z), "w5c": w5c.reshape(1, -1).astype(jnp.float32), "b5": Bv(b5),
        "w6": W(w6), "b6": Bv(b6), "w7": W(w7), "b7": Bv(b7),
        "w8": W(w8), "b8": Bv(b8),
    }


_WEIGHT_ORDER = ("w1", "b1", "w2", "b2", "w3", "b3", "w4", "b4",
                 "w5z", "w5c", "b5", "w6", "b6", "w7", "b7", "w8", "b8")


# ----------------------------------------------------------------------------
# Forward wrapper: one pallas_call, grid over batch tiles.
# ----------------------------------------------------------------------------
def forward(folded, x, c, *, tile_b=512):
    """x: (B,1,8,8) NCHW, c: (B,1) condition -> (B,1,8,8) reconstruction."""
    B = x.shape[0]
    x_flat = x.reshape(B, -1).astype(jnp.float32)          # NCHW flatten -> (B, 64)
    c_col = jnp.asarray(c, jnp.float32).reshape(B, 1)
    d_in = x_flat.shape[1]
    d_out = folded["w8"].shape[1]

    # batch tile: multiple of 8 sublanes; pad B to a whole number of tiles.
    tb = min(tile_b, _round_up(B, 8))
    bp = _round_up(B, tb)
    if bp != B:
        x_flat = jnp.pad(x_flat, ((0, bp - B), (0, 0)))
        c_col = jnp.pad(c_col, ((0, bp - B), (0, 0)))

    w_args = [folded[n] for n in _WEIGHT_ORDER]

    in_specs = [pl.BlockSpec((tb, d_in), lambda i: (i, 0)),
                pl.BlockSpec((tb, 1), lambda i: (i, 0))]
    # Weights/biases: whole array, same block every grid step -> VMEM-resident
    # for the entire kernel (no re-fetch between batch tiles).
    in_specs += [pl.BlockSpec(w.shape, lambda i: (0, 0)) for w in w_args]

    out = pl.pallas_call(
        _cae_fused_kernel,
        out_shape=jax.ShapeDtypeStruct((bp, d_out), jnp.float32),
        grid=(bp // tb,),
        in_specs=in_specs,
        out_specs=pl.BlockSpec((tb, d_out), lambda i: (i, 0)),
        compiler_params=pltpu.CompilerParams(
            dimension_semantics=("parallel",),   # shard batch tiles over TCs on v7x
            vmem_limit_bytes=32 * 1024 * 1024),  # safe on v5e/v6e/v7x; footprint << limit
    )(x_flat, c_col, *w_args)

    return out[:B].reshape(B, 1, 8, 8)


# ----------------------------------------------------------------------------
# Pure-JAX reference (same folded weights / same bf16 compute path).
# ----------------------------------------------------------------------------
def reference_forward(folded, x, c):
    B = x.shape[0]
    h = x.reshape(B, -1).astype(jnp.float32)
    cc = jnp.asarray(c, jnp.float32).reshape(B, 1)
    dense = lambda a, w, b: jnp.dot(a.astype(w.dtype), w,
                                    preferred_element_type=jnp.float32) + b
    relu = lambda t: jnp.maximum(t, 0.0)
    h = relu(dense(h, folded["w1"], folded["b1"]))
    h = relu(dense(h, folded["w2"], folded["b2"]))
    h = relu(dense(h, folded["w3"], folded["b3"]))
    z = dense(h, folded["w4"], folded["b4"])
    h = jnp.dot(z.astype(folded["w5z"].dtype), folded["w5z"],
                preferred_element_type=jnp.float32)
    h = relu(h + cc * folded["w5c"] + folded["b5"])
    h = relu(dense(h, folded["w6"], folded["b6"]))
    h = relu(dense(h, folded["w7"], folded["b7"]))
    logits = dense(h, folded["w8"], folded["b8"])
    return jax.nn.sigmoid(logits).reshape(B, 1, 8, 8)


# ----------------------------------------------------------------------------
# Deterministic parameter init (shapes from the assumed architecture).
# ----------------------------------------------------------------------------
def init_params(key, latent_dims=16):
    def p(k, shape, fan_in):
        return jax.random.normal(k, shape, jnp.float32) / jnp.sqrt(float(fan_in))

    ks = jax.random.split(key, 8)
    return {
        "enc_conv1_w": p(ks[0], (8, 1, 3, 3), 1 * 9),
        "enc_conv1_b": jnp.zeros((8,), jnp.float32),
        "enc_conv2_w": p(ks[1], (16, 8, 3, 3), 8 * 9),
        "enc_conv2_b": jnp.zeros((16,), jnp.float32),
        "enc_fc1_w": p(ks[2], (64, 256), 256),
        "enc_fc1_b": jnp.zeros((64,), jnp.float32),
        "enc_fc2_w": p(ks[3], (latent_dims, 64), 64),
        "enc_fc2_b": jnp.zeros((latent_dims,), jnp.float32),
        "dec_fc1_w": p(ks[4], (64, latent_dims + 1), latent_dims + 1),
        "dec_fc1_b": jnp.zeros((64,), jnp.float32),
        "dec_fc2_w": p(ks[5], (256, 64), 64),
        "dec_fc2_b": jnp.zeros((256,), jnp.float32),
        "dec_deconv1_w": p(ks[6], (16, 8, 3, 3), 16 * 9),   # ConvTranspose layout
        "dec_deconv1_b": jnp.zeros((8,), jnp.float32),
        "dec_conv_out_w": p(ks[7], (1, 8, 3, 3), 8 * 9),
        "dec_conv_out_b": jnp.zeros((1,), jnp.float32),
    }


if __name__ == "__main__":
    key = jax.random.PRNGKey(0)
    kx, kc, kp = jax.random.split(key, 3)
    # NCHW input: single-channel 8x8 sensor window, batch=2, 1 condition scalar.
    x = jax.random.uniform(kx, (2, 1, 8, 8), jnp.float32)
    c = jax.random.uniform(kc, (2, 1), jnp.float32)
    params = init_params(kp, latent_dims=16)
    folded = fold_params(params, latent_dims=16)

    fwd = jax.jit(forward)
    y = jax.block_until_ready(fwd(folded, x, c))

    assert y.shape == (2, 1, 8, 8) and y.dtype == jnp.float32
    assert bool(jnp.all(jnp.isfinite(y)))
    y_ref = reference_forward(folded, x, c)
    assert bool(jnp.max(jnp.abs(y - y_ref)) < 2e-2)
    print("KERNEL_OK")
</pallas_src>

<mosaic_0001>
module attributes {stable_mosaic.version = 11 : i64} {
  func.func @_cae_fused_kernel(%arg0: i32, %arg1: memref<8x64xf32, #tpu.memory_space<vmem>>, %arg2: memref<8x1xf32, #tpu.memory_space<vmem>>, %arg3: memref<64x512xbf16, #tpu.memory_space<vmem>>, %arg4: memref<1x512xf32, #tpu.memory_space<vmem>>, %arg5: memref<512x256xbf16, #tpu.memory_space<vmem>>, %arg6: memref<1x256xf32, #tpu.memory_space<vmem>>, %arg7: memref<256x64xbf16, #tpu.memory_space<vmem>>, %arg8: memref<1x64xf32, #tpu.memory_space<vmem>>, %arg9: memref<64x16xbf16, #tpu.memory_space<vmem>>, %arg10: memref<1x16xf32, #tpu.memory_space<vmem>>, %arg11: memref<16x64xbf16, #tpu.memory_space<vmem>>, %arg12: memref<1x64xf32, #tpu.memory_space<vmem>>, %arg13: memref<1x64xf32, #tpu.memory_space<vmem>>, %arg14: memref<64x256xbf16, #tpu.memory_space<vmem>>, %arg15: memref<1x256xf32, #tpu.memory_space<vmem>>, %arg16: memref<256x512xbf16, #tpu.memory_space<vmem>>, %arg17: memref<1x512xf32, #tpu.memory_space<vmem>>, %arg18: memref<512x64xbf16, #tpu.memory_space<vmem>>, %arg19: memref<1x64xf32, #tpu.memory_space<vmem>>, %arg20: memref<8x64xf32, #tpu.memory_space<vmem>>) attributes {dimension_semantics = [#tpu.dimension_semantics<parallel>], iteration_bounds = array<i64: 1>, scalar_prefetch = 0 : i64, scratch_operands = 0 : i64, tpu.core_type = #tpu.core_type<tc>, window_params = [{transform_indices = @transform_0, window_bounds = array<i64: 8, 64>}, {transform_indices = @transform_1, window_bounds = array<i64: 8, 1>}, {pipeline_mode = #tpu.pipeline_mode<synchronous>, transform_indices = @transform_2, window_bounds = array<i64: 64, 512>}, {pipeline_mode = #tpu.pipeline_mode<synchronous>, transform_indices = @transform_3, window_bounds = array<i64: 1, 512>}, {pipeline_mode = #tpu.pipeline_mode<synchronous>, transform_indices = @transform_4, window_bounds = array<i64: 512, 256>}, {pipeline_mode = #tpu.pipeline_mode<synchronous>, transform_indices = @transform_5, window_bounds = array<i64: 1, 256>}, {pipeline_mode = #tpu.pipeline_mode<synchronous>, transform_indices = @transform_6, window_bounds = array<i64: 256, 64>}, {pipeline_mode = #tpu.pipeline_mode<synchronous>, transform_indices = @transform_7, window_bounds = array<i64: 1, 64>}, {pipeline_mode = #tpu.pipeline_mode<synchronous>, transform_indices = @transform_8, window_bounds = array<i64: 64, 16>}, {pipeline_mode = #tpu.pipeline_mode<synchronous>, transform_indices = @transform_9, window_bounds = array<i64: 1, 16>}, {pipeline_mode = #tpu.pipeline_mode<synchronous>, transform_indices = @transform_10, window_bounds = array<i64: 16, 64>}, {pipeline_mode = #tpu.pipeline_mode<synchronous>, transform_indices = @transform_11, window_bounds = array<i64: 1, 64>}, {pipeline_mode = #tpu.pipeline_mode<synchronous>, transform_indices = @transform_12, window_bounds = array<i64: 1, 64>}, {pipeline_mode = #tpu.pipeline_mode<synchronous>, transform_indices = @transform_13, window_bounds = array<i64: 64, 256>}, {pipeline_mode = #tpu.pipeline_mode<synchronous>, transform_indices = @transform_14, window_bounds = array<i64: 1, 256>}, {pipeline_mode = #tpu.pipeline_mode<synchronous>, transform_indices = @transform_15, window_bounds = array<i64: 256, 512>}, {pipeline_mode = #tpu.pipeline_mode<synchronous>, transform_indices = @transform_16, window_bounds = array<i64: 1, 512>}, {pipeline_mode = #tpu.pipeline_mode<synchronous>, transform_indices = @transform_17, window_bounds = array<i64: 512, 64>}, {pipeline_mode = #tpu.pipeline_mode<synchronous>, transform_indices = @transform_18, window_bounds = array<i64: 1, 64>}, {transform_indices = @transform_19, window_bounds = array<i64: 8, 64>}]} {
    %c0 = arith.constant 0 : index
    %c0_0 = arith.constant 0 : index
    %0 = vector.load %arg1[%c0, %c0_0] : memref<8x64xf32, #tpu.memory_space<vmem>>, vector<8x64xf32>
    %1 = arith.truncf %0 : vector<8x64xf32> to vector<8x64xbf16>
    %c0_1 = arith.constant 0 : index
    %c0_2 = arith.constant 0 : index
    %2 = vector.load %arg3[%c0_1, %c0_2] : memref<64x512xbf16, #tpu.memory_space<vmem>>, vector<64x512xbf16>
    %cst = arith.constant dense<0.000000e+00> : vector<8x512xf32>
    %3 = tpu.matmul %1, %2, %cst {dimension_numbers = #tpu.dot_dimension_numbers<[1], [0], [0], [1], [0, 0, 1, 1], [], []>} : vector<8x64xbf16>, vector<64x512xbf16>, vector<8x512xf32> -> vector<8x512xf32>
    %c0_3 = arith.constant 0 : index
    %c0_4 = arith.constant 0 : index
    %4 = vector.load %arg4[%c0_3, %c0_4] : memref<1x512xf32, #tpu.memory_space<vmem>>, vector<1x512xf32>
    %5 = vector.broadcast %4 : vector<1x512xf32> to vector<8x512xf32>
    %6 = arith.addf %3, %5 : vector<8x512xf32>
    %cst_5 = arith.constant 0.000000e+00 : f32
    %7 = vector.broadcast %cst_5 : f32 to vector<8x512xf32>
    %8 = arith.maximumf %6, %7 : vector<8x512xf32>
    %9 = arith.truncf %8 : vector<8x512xf32> to vector<8x512xbf16>
    %c0_6 = arith.constant 0 : index
    %c0_7 = arith.constant 0 : index
    %10 = vector.load %arg5[%c0_6, %c0_7] : memref<512x256xbf16, #tpu.memory_space<vmem>>, vector<512x256xbf16>
    %cst_8 = arith.constant dense<0.000000e+00> : vector<8x256xf32>
    %11 = tpu.matmul %9, %10, %cst_8 {dimension_numbers = #tpu.dot_dimension_numbers<[1], [0], [0], [1], [0, 0, 1, 1], [], []>} : vector<8x512xbf16>, vector<512x256xbf16>, vector<8x256xf32> -> vector<8x256xf32>
    %c0_9 = arith.constant 0 : index
    %c0_10 = arith.constant 0 : index
    %12 = vector.load %arg6[%c0_9, %c0_10] : memref<1x256xf32, #tpu.memory_space<vmem>>, vector<1x256xf32>
    %13 = vector.broadcast %12 : vector<1x256xf32> to vector<8x256xf32>
    %14 = arith.addf %11, %13 : vector<8x256xf32>
    %cst_11 = arith.constant 0.000000e+00 : f32
    %15 = vector.broadcast %cst_11 : f32 to vector<8x256xf32>
    %16 = arith.maximumf %14, %15 : vector<8x256xf32>
    %17 = arith.truncf %16 : vector<8x256xf32> to vector<8x256xbf16>
    %c0_12 = arith.constant 0 : index
    %c0_13 = arith.constant 0 : index
    %18 = vector.load %arg7[%c0_12, %c0_13] : memref<256x64xbf16, #tpu.memory_space<vmem>>, vector<256x64xbf16>
    %cst_14 = arith.constant dense<0.000000e+00> : vector<8x64xf32>
    %19 = tpu.matmul %17, %18, %cst_14 {dimension_numbers = #tpu.dot_dimension_numbers<[1], [0], [0], [1], [0, 0, 1, 1], [], []>} : vector<8x256xbf16>, vector<256x64xbf16>, vector<8x64xf32> -> vector<8x64xf32>
    %c0_15 = arith.constant 0 : index
    %c0_16 = arith.constant 0 : index
    %20 = vector.load %arg8[%c0_15, %c0_16] : memref<1x64xf32, #tpu.memory_space<vmem>>, vector<1x64xf32>
    %21 = vector.broadcast %20 : vector<1x64xf32> to vector<8x64xf32>
    %22 = arith.addf %19, %21 : vector<8x64xf32>
    %cst_17 = arith.constant 0.000000e+00 : f32
    %23 = vector.broadcast %cst_17 : f32 to vector<8x64xf32>
    %24 = arith.maximumf %22, %23 : vector<8x64xf32>
    %25 = arith.truncf %24 : vector<8x64xf32> to vector<8x64xbf16>
    %c0_18 = arith.constant 0 : index
    %c0_19 = arith.constant 0 : index
    %26 = vector.load %arg9[%c0_18, %c0_19] : memref<64x16xbf16, #tpu.memory_space<vmem>>, vector<64x16xbf16>
    %cst_20 = arith.constant dense<0.000000e+00> : vector<8x16xf32>
    %27 = tpu.matmul %25, %26, %cst_20 {dimension_numbers = #tpu.dot_dimension_numbers<[1], [0], [0], [1], [0, 0, 1, 1], [], []>} : vector<8x64xbf16>, vector<64x16xbf16>, vector<8x16xf32> -> vector<8x16xf32>
    %c0_21 = arith.constant 0 : index
    %c0_22 = arith.constant 0 : index
    %28 = vector.load %arg10[%c0_21, %c0_22] : memref<1x16xf32, #tpu.memory_space<vmem>>, vector<1x16xf32>
    %29 = vector.broadcast %28 : vector<1x16xf32> to vector<8x16xf32>
    %30 = arith.addf %27, %29 : vector<8x16xf32>
    %c0_23 = arith.constant 0 : index
    %c0_24 = arith.constant 0 : index
    %31 = vector.load %arg2[%c0_23, %c0_24] : memref<8x1xf32, #tpu.memory_space<vmem>>, vector<8x1xf32>
    %32 = arith.truncf %30 : vector<8x16xf32> to vector<8x16xbf16>
    %c0_25 = arith.constant 0 : index
    %c0_26 = arith.constant 0 : index
    %33 = vector.load %arg11[%c0_25, %c0_26] : memref<16x64xbf16, #tpu.memory_space<vmem>>, vector<16x64xbf16>
    %cst_27 = arith.constant dense<0.000000e+00> : vector<8x64xf32>
    %34 = tpu.matmul %32, %33, %cst_27 {dimension_numbers = #tpu.dot_dimension_numbers<[1], [0], [0], [1], [0, 0, 1, 1], [], []>} : vector<8x16xbf16>, vector<16x64xbf16>, vector<8x64xf32> -> vector<8x64xf32>
    %c0_28 = arith.constant 0 : index
    %c0_29 = arith.constant 0 : index
    %35 = vector.load %arg12[%c0_28, %c0_29] : memref<1x64xf32, #tpu.memory_space<vmem>>, vector<1x64xf32>
    %36 = vector.broadcast %31 : vector<8x1xf32> to vector<8x64xf32>
    %37 = vector.broadcast %35 : vector<1x64xf32> to vector<8x64xf32>
    %38 = arith.mulf %36, %37 : vector<8x64xf32>
    %39 = arith.addf %34, %38 : vector<8x64xf32>
    %c0_30 = arith.constant 0 : index
    %c0_31 = arith.constant 0 : index
    %40 = vector.load %arg13[%c0_30, %c0_31] : memref<1x64xf32, #tpu.memory_space<vmem>>, vector<1x64xf32>
    %41 = vector.broadcast %40 : vector<1x64xf32> to vector<8x64xf32>
    %42 = arith.addf %39, %41 : vector<8x64xf32>
    %cst_32 = arith.constant 0.000000e+00 : f32
    %43 = vector.broadcast %cst_32 : f32 to vector<8x64xf32>
    %44 = arith.maximumf %42, %43 : vector<8x64xf32>
    %45 = arith.truncf %44 : vector<8x64xf32> to vector<8x64xbf16>
    %c0_33 = arith.constant 0 : index
    %c0_34 = arith.constant 0 : index
    %46 = vector.load %arg14[%c0_33, %c0_34] : memref<64x256xbf16, #tpu.memory_space<vmem>>, vector<64x256xbf16>
    %cst_35 = arith.constant dense<0.000000e+00> : vector<8x256xf32>
    %47 = tpu.matmul %45, %46, %cst_35 {dimension_numbers = #tpu.dot_dimension_numbers<[1], [0], [0], [1], [0, 0, 1, 1], [], []>} : vector<8x64xbf16>, vector<64x256xbf16>, vector<8x256xf32> -> vector<8x256xf32>
    %c0_36 = arith.constant 0 : index
    %c0_37 = arith.constant 0 : index
    %48 = vector.load %arg15[%c0_36, %c0_37] : memref<1x256xf32, #tpu.memory_space<vmem>>, vector<1x256xf32>
    %49 = vector.broadcast %48 : vector<1x256xf32> to vector<8x256xf32>
    %50 = arith.addf %47, %49 : vector<8x256xf32>
    %cst_38 = arith.constant 0.000000e+00 : f32
    %51 = vector.broadcast %cst_38 : f32 to vector<8x256xf32>
    %52 = arith.maximumf %50, %51 : vector<8x256xf32>
    %53 = arith.truncf %52 : vector<8x256xf32> to vector<8x256xbf16>
    %c0_39 = arith.constant 0 : index
    %c0_40 = arith.constant 0 : index
    %54 = vector.load %arg16[%c0_39, %c0_40] : memref<256x512xbf16, #tpu.memory_space<vmem>>, vector<256x512xbf16>
    %cst_41 = arith.constant dense<0.000000e+00> : vector<8x512xf32>
    %55 = tpu.matmul %53, %54, %cst_41 {dimension_numbers = #tpu.dot_dimension_numbers<[1], [0], [0], [1], [0, 0, 1, 1], [], []>} : vector<8x256xbf16>, vector<256x512xbf16>, vector<8x512xf32> -> vector<8x512xf32>
    %c0_42 = arith.constant 0 : index
    %c0_43 = arith.constant 0 : index
    %56 = vector.load %arg17[%c0_42, %c0_43] : memref<1x512xf32, #tpu.memory_space<vmem>>, vector<1x512xf32>
    %57 = vector.broadcast %56 : vector<1x512xf32> to vector<8x512xf32>
    %58 = arith.addf %55, %57 : vector<8x512xf32>
    %cst_44 = arith.constant 0.000000e+00 : f32
    %59 = vector.broadcast %cst_44 : f32 to vector<8x512xf32>
    %60 = arith.maximumf %58, %59 : vector<8x512xf32>
    %61 = arith.truncf %60 : vector<8x512xf32> to vector<8x512xbf16>
    %c0_45 = arith.constant 0 : index
    %c0_46 = arith.constant 0 : index
    %62 = vector.load %arg18[%c0_45, %c0_46] : memref<512x64xbf16, #tpu.memory_space<vmem>>, vector<512x64xbf16>
    %cst_47 = arith.constant dense<0.000000e+00> : vector<8x64xf32>
    %63 = tpu.matmul %61, %62, %cst_47 {dimension_numbers = #tpu.dot_dimension_numbers<[1], [0], [0], [1], [0, 0, 1, 1], [], []>} : vector<8x512xbf16>, vector<512x64xbf16>, vector<8x64xf32> -> vector<8x64xf32>
    %c0_48 = arith.constant 0 : index
    %c0_49 = arith.constant 0 : index
    %64 = vector.load %arg19[%c0_48, %c0_49] : memref<1x64xf32, #tpu.memory_space<vmem>>, vector<1x64xf32>
    %65 = vector.broadcast %64 : vector<1x64xf32> to vector<8x64xf32>
    %66 = arith.addf %63, %65 : vector<8x64xf32>
    %67 = math.absf %66 : vector<8x64xf32>
    %cst_50 = arith.constant 0.000000e+00 : f32
    %68 = vector.broadcast %cst_50 : f32 to vector<8x64xf32>
    %69 = arith.subf %68, %67 : vector<8x64xf32>
    %70 = math.exp %69 : vector<8x64xf32>
    %cst_51 = arith.constant 1.000000e+00 : f32
    %71 = vector.broadcast %cst_51 : f32 to vector<8x64xf32>
    %72 = arith.addf %71, %70 : vector<8x64xf32>
    %73 = tpu.reciprocal %72 {approx = true} : vector<8x64xf32> -> vector<8x64xf32>
    %cst_52 = arith.constant 0.000000e+00 : f32
    %74 = vector.broadcast %cst_52 : f32 to vector<8x64xf32>
    %75 = arith.cmpf oge, %66, %74 : vector<8x64xf32>
    %76 = arith.mulf %70, %73 : vector<8x64xf32>
    %77 = arith.select %75, %73, %76 : vector<8x64xi1>, vector<8x64xf32>
    %c0_53 = arith.constant 0 : index
    %c0_54 = arith.constant 0 : index
    %78 = vector.load %arg20[%c0_53, %c0_54] : memref<8x64xf32, #tpu.memory_space<vmem>>, vector<8x64xf32>
    tpu.vector_store %arg20[%c0_53, %c0_54], %77 {strides = array<i32>} : memref<8x64xf32, #tpu.memory_space<vmem>>, vector<8x64xf32>,
    return
  }
  func.func @transform_0(%arg0: i32) -> (i32, i32) {
    %c0_i32 = arith.constant 0 : i32
    %c0_i32_0 = arith.constant 0 : i32
    return %arg0, %c0_i32 : i32, i32
  }
  func.func @transform_1(%arg0: i32) -> (i32, i32) {
    %c0_i32 = arith.constant 0 : i32
    %c0_i32_0 = arith.constant 0 : i32
    return %arg0, %c0_i32 : i32, i32
  }
  func.func @transform_2(%arg0: i32) -> (i32, i32) {
    %c0_i32 = arith.constant 0 : i32
    %c0_i32_0 = arith.constant 0 : i32
    %c0_i32_1 = arith.constant 0 : i32
    return %c0_i32, %c0_i32_0 : i32, i32
  }
  func.func @transform_3(%arg0: i32) -> (i32, i32) {
    %c0_i32 = arith.constant 0 : i32
    %c0_i32_0 = arith.constant 0 : i32
    %c0_i32_1 = arith.constant 0 : i32
    return %c0_i32, %c0_i32_0 : i32, i32
  }
  func.func @transform_4(%arg0: i32) -> (i32, i32) {
    %c0_i32 = arith.constant 0 : i32
    %c0_i32_0 = arith.constant 0 : i32
    %c0_i32_1 = arith.constant 0 : i32
    return %c0_i32, %c0_i32_0 : i32, i32
  }
  func.func @transform_5(%arg0: i32) -> (i32, i32) {
    %c0_i32 = arith.constant 0 : i32
    %c0_i32_0 = arith.constant 0 : i32
    %c0_i32_1 = arith.constant 0 : i32
    return %c0_i32, %c0_i32_0 : i32, i32
  }
  func.func @transform_6(%arg0: i32) -> (i32, i32) {
    %c0_i32 = arith.constant 0 : i32
    %c0_i32_0 = arith.constant 0 : i32
    %c0_i32_1 = arith.constant 0 : i32
    return %c0_i32, %c0_i32_0 : i32, i32
  }
  func.func @transform_7(%arg0: i32) -> (i32, i32) {
    %c0_i32 = arith.constant 0 : i32
    %c0_i32_0 = arith.constant 0 : i32
    %c0_i32_1 = arith.constant 0 : i32
    return %c0_i32, %c0_i32_0 : i32, i32
  }
  func.func @transform_8(%arg0: i32) -> (i32, i32) {
    %c0_i32 = arith.constant 0 : i32
    %c0_i32_0 = arith.constant 0 : i32
    %c0_i32_1 = arith.constant 0 : i32
    return %c0_i32, %c0_i32_0 : i32, i32
  }
  func.func @transform_9(%arg0: i32) -> (i32, i32) {
    %c0_i32 = arith.constant 0 : i32
    %c0_i32_0 = arith.constant 0 : i32
    %c0_i32_1 = arith.constant 0 : i32
    return %c0_i32, %c0_i32_0 : i32, i32
  }
  func.func @transform_10(%arg0: i32) -> (i32, i32) {
    %c0_i32 = arith.constant 0 : i32
    %c0_i32_0 = arith.constant 0 : i32
    %c0_i32_1 = arith.constant 0 : i32
    return %c0_i32, %c0_i32_0 : i32, i32
  }
  func.func @transform_11(%arg0: i32) -> (i32, i32) {
    %c0_i32 = arith.constant 0 : i32
    %c0_i32_0 = arith.constant 0 : i32
    %c0_i32_1 = arith.constant 0 : i32
    return %c0_i32, %c0_i32_0 : i32, i32
  }
  func.func @transform_12(%arg0: i32) -> (i32, i32) {
    %c0_i32 = arith.constant 0 : i32
    %c0_i32_0 = arith.constant 0 : i32
    %c0_i32_1 = arith.constant 0 : i32
    return %c0_i32, %c0_i32_0 : i32, i32
  }
  func.func @transform_13(%arg0: i32) -> (i32, i32) {
    %c0_i32 = arith.constant 0 : i32
    %c0_i32_0 = arith.constant 0 : i32
    %c0_i32_1 = arith.constant 0 : i32
    return %c0_i32, %c0_i32_0 : i32, i32
  }
  func.func @transform_14(%arg0: i32) -> (i32, i32) {
    %c0_i32 = arith.constant 0 : i32
    %c0_i32_0 = arith.constant 0 : i32
    %c0_i32_1 = arith.constant 0 : i32
    return %c0_i32, %c0_i32_0 : i32, i32
  }
  func.func @transform_15(%arg0: i32) -> (i32, i32) {
    %c0_i32 = arith.constant 0 : i32
    %c0_i32_0 = arith.constant 0 : i32
    %c0_i32_1 = arith.constant 0 : i32
    return %c0_i32, %c0_i32_0 : i32, i32
  }
  func.func @transform_16(%arg0: i32) -> (i32, i32) {
    %c0_i32 = arith.constant 0 : i32
    %c0_i32_0 = arith.constant 0 : i32
    %c0_i32_1 = arith.constant 0 : i32
    return %c0_i32, %c0_i32_0 : i32, i32
  }
  func.func @transform_17(%arg0: i32) -> (i32, i32) {
    %c0_i32 = arith.constant 0 : i32
    %c0_i32_0 = arith.constant 0 : i32
    %c0_i32_1 = arith.constant 0 : i32
    return %c0_i32, %c0_i32_0 : i32, i32
  }
  func.func @transform_18(%arg0: i32) -> (i32, i32) {
    %c0_i32 = arith.constant 0 : i32
    %c0_i32_0 = arith.constant 0 : i32
    %c0_i32_1 = arith.constant 0 : i32
    return %c0_i32, %c0_i32_0 : i32, i32
  }
  func.func @transform_19(%arg0: i32) -> (i32, i32) {
    %c0_i32 = arith.constant 0 : i32
    %c0_i32_0 = arith.constant 0 : i32
    return %arg0, %c0_i32 : i32, i32
  }
}

</mosaic_0001>

<llo_original>
// kernel: forward.1
$region0: #{forward.1}
  #allocation0 [shape = 'u32[]', space=smem, size = 0x4, offset = 0x4, fixed_abs, tag = 'smem constant byte address 0x4 - core index']
  #allocation1 [shape = 'u32[72,128]{1,0:T(1,128)}', space=vmem, size = 0x9000, scoped, tag = 'internal scratch']
  %s0 = inlined_call_operand.vmem [shape: f32[8,64], index: 0, kind: input, shape index: {}]
  %s1 = inlined_call_operand.vmem [shape: f32[8,1], index: 1, kind: input, shape index: {}]
  %s2 = inlined_call_operand.vmem [shape: bf16[64,512], index: 2, kind: input, shape index: {}]
  %s3 = inlined_call_operand.vmem [shape: f32[1,512], index: 3, kind: input, shape index: {}]
  %s4 = inlined_call_operand.hbm [shape: bf16[512,256], index: 4, kind: input, shape index: {}]
  %s5 = inlined_call_operand.vmem [shape: f32[1,256], index: 5, kind: input, shape index: {}]
  %s6 = inlined_call_operand.vmem [shape: bf16[256,64], index: 6, kind: input, shape index: {}]
  %s7 = inlined_call_operand.vmem [shape: f32[1,64], index: 7, kind: input, shape index: {}]
  %s8 = inlined_call_operand.vmem [shape: bf16[64,16], index: 8, kind: input, shape index: {}]
  %s9 = inlined_call_operand.vmem [shape: f32[1,16], index: 9, kind: input, shape index: {}]
  %s10 = inlined_call_operand.vmem [shape: bf16[16,64], index: 10, kind: input, shape index: {}]
  %s11 = inlined_call_operand.vmem [shape: f32[1,64], index: 11, kind: input, shape index: {}]
  %s12 = inlined_call_operand.vmem [shape: f32[1,64], index: 12, kind: input, shape index: {}]
  %s13 = inlined_call_operand.vmem [shape: bf16[64,256], index: 13, kind: input, shape index: {}]
  %s14 = inlined_call_operand.vmem [shape: f32[1,256], index: 14, kind: input, shape index: {}]
  %s15 = inlined_call_operand.hbm [shape: bf16[256,512], index: 15, kind: input, shape index: {}]
  %s16 = inlined_call_operand.vmem [shape: f32[1,512], index: 16, kind: input, shape index: {}]
  %s17 = inlined_call_operand.vmem [shape: bf16[512,64], index: 17, kind: input, shape index: {}]
  %s18 = inlined_call_operand.vmem [shape: f32[1,64], index: 18, kind: input, shape index: {}]
  %s19 = inlined_call_operand.vmem [shape: f32[8,64], index: 19, kind: output, shape index: {}]
  %s20 = sld [smem:[#allocation0]]
  $region94: #{forward.1} parent=0
    _
  %s22 = ssub.s32 1, %s20
  %s23 = scalar_select 0, %s22, %s20
  $region1: #{forward.1} parent=0
    #allocation2 [shape = 'u8[262144]{0}', space=vmem, size = 0x40000, scoped, tag = 'input window, operand 4, single buffered']
    #allocation3 [shape = 's32[1]{0}', space=sflag, size = 0x4, scoped, tag = 'scoped memory for forward.1']
    #allocation4 [shape = 'u8[262144]{0}', space=vmem, size = 0x40000, scoped, tag = 'input window, operand 15, single buffered']
    #allocation5 [shape = 's32[1]{0}', space=sflag, size = 0x4, scoped, tag = 'scoped memory for forward.1']
    %24 = vsyncpa [#allocation3], 0
    %25 = vsyncpa [#allocation5], 0
    // Predicated region
    $region2: #{forward.1} parent=1 // pred_check
      _
    $region3: #{forward.1} parent=1 // pred_check_branch
      %27 = sbr.rel (0) target = $region5
    $region4: #{forward.1} parent=1 // pred_region
      _
    $region5: #{forward.1} parent=1 // pred_fallthru
      _
    // Predicated region
    $region6: #{forward.1} parent=1 // pred_check
      _
    $region7: #{forward.1} parent=1 // pred_check_branch
      %29 = sbr.rel (0) target = $region9
    $region8: #{forward.1} parent=1 // pred_region
      _
    $region9: #{forward.1} parent=1 // pred_fallthru
      _
    // Predicated region
    $region10: #{forward.1} parent=1 // pred_check
      _
    $region11: #{forward.1} parent=1 // pred_check_branch
      %31 = sbr.rel (0) target = $region13
    $region12: #{forward.1} parent=1 // pred_region
      _
    $region13: #{forward.1} parent=1 // pred_fallthru
      _
    // Predicated region
    $region14: #{forward.1} parent=1 // pred_check
      _
    $region15: #{forward.1} parent=1 // pred_check_branch
      %33 = sbr.rel (0) target = $region17
    $region16: #{forward.1} parent=1 // pred_region
      _
    $region17: #{forward.1} parent=1 // pred_fallthru
      _
    // Predicated region
    $region18: #{forward.1} parent=1 // pred_check
      _
    $region19: #{forward.1} parent=1 // pred_check_branch
      %35 = sbr.rel (0) target = $region21
    $region20: #{forward.1} parent=1 // pred_region
      %37 = vsyncadd [#allocation3], 0
      %s38 = sshll.u32 %s4, 4
      %s39 = int_to_ptr.hbm [resolvable:$true] %s38
      %s40 = sshll.u32 [#allocation2], 4
      %s41 = int_to_ptr.vmem [resolvable:$true] %s40
      %46 = dma.hbm_to_vmem [thread:$0]  %s39, 8192, %s41, [#allocation3], 128, 128, 8
    $region21: #{forward.1} parent=1 // pred_fallthru
      _
    // Predicated region
    $region22: #{forward.1} parent=1 // pred_check
      _
    $region23: #{forward.1} parent=1 // pred_check_branch
      %48 = sbr.rel (0) target = $region25
    $region24: #{forward.1} parent=1 // pred_region
      _
    $region25: #{forward.1} parent=1 // pred_fallthru
      _
    // Predicated region
    $region26: #{forward.1} parent=1 // pred_check
      _
    $region27: #{forward.1} parent=1 // pred_check_branch
      %50 = sbr.rel (0) target = $region29
    $region28: #{forward.1} parent=1 // pred_region
      _
    $region29: #{forward.1} parent=1 // pred_fallthru
      _
    // Predicated region
    $region30: #{forward.1} parent=1 // pred_check
      _
    $region31: #{forward.1} parent=1 // pred_check_branch
      %52 = sbr.rel (0) target = $region33
    $region32: #{forward.1} parent=1 // pred_region
      _
    $region33: #{forward.1} parent=1 // pred_fallthru
      _
    // Predicated region
    $region34: #{forward.1} parent=1 // pred_check
      _
    $region35: #{forward.1} parent=1 // pred_check_branch
      %54 = sbr.rel (0) target = $region37
    $region36: #{forward.1} parent=1 // pred_region
      _
    $region37: #{forward.1} parent=1 // pred_fallthru
      _
    // Predicated region
    $region38: #{forward.1} parent=1 // pred_check
      _
    $region39: #{forward.1} parent=1 // pred_check_branch
      %56 = sbr.rel (0) target = $region41
    $region40: #{forward.1} parent=1 // pred_region
      _
    $region41: #{forward.1} parent=1 // pred_fallthru
      _
    // Predicated region
    $region42: #{forward.1} parent=1 // pred_check
      _
    $region43: #{forward.1} parent=1 // pred_check_branch
      %58 = sbr.rel (0) target = $region45
    $region44: #{forward.1} parent=1 // pred_region
      _
    $region45: #{forward.1} parent=1 // pred_fallthru
      _
    // Predicated region
    $region46: #{forward.1} parent=1 // pred_check
      _
    $region47: #{forward.1} parent=1 // pred_check_branch
      %60 = sbr.rel (0) target = $region49
    $region48: #{forward.1} parent=1 // pred_region
      _
    $region49: #{forward.1} parent=1 // pred_fallthru
      _
    // Predicated region
    $region50: #{forward.1} parent=1 // pred_check
      _
    $region51: #{forward.1} parent=1 // pred_check_branch
      %62 = sbr.rel (0) target = $region53
    $region52: #{forward.1} parent=1 // pred_region
      _
    $region53: #{forward.1} parent=1 // pred_fallthru
      _
    // Predicated region
    $region54: #{forward.1} parent=1 // pred_check
      _
    $region55: #{forward.1} parent=1 // pred_check_branch
      %64 = sbr.rel (0) target = $region57
    $region56: #{forward.1} parent=1 // pred_region
      _
    $region57: #{forward.1} parent=1 // pred_fallthru
      _
    // Predicated region
    $region58: #{forward.1} parent=1 // pred_check
      _
    $region59: #{forward.1} parent=1 // pred_check_branch
      %66 = sbr.rel (0) target = $region61
    $region60: #{forward.1} parent=1 // pred_region
      _
    $region61: #{forward.1} parent=1 // pred_fallthru
      _
    // Predicated region
    $region62: #{forward.1} parent=1 // pred_check
      _
    $region63: #{forward.1} parent=1 // pred_check_branch
      %68 = sbr.rel (0) target = $region65
    $region64: #{forward.1} parent=1 // pred_region
      %70 = vsyncadd [#allocation5], 0
      %s71 = sshll.u32 %s15, 4
      %s72 = int_to_ptr.hbm [resolvable:$true] %s71
      %s73 = sshll.u32 [#allocation4], 4
      %s74 = int_to_ptr.vmem [resolvable:$true] %s73
      %79 = dma.hbm_to_vmem [thread:$0]  %s72, 8192, %s74, [#allocation5], 256, 256, 16
    $region65: #{forward.1} parent=1 // pred_fallthru
      _
    // Predicated region
    $region66: #{forward.1} parent=1 // pred_check
      _
    $region67: #{forward.1} parent=1 // pred_check_branch
      %81 = sbr.rel (0) target = $region69
    $region68: #{forward.1} parent=1 // pred_region
      _
    $region69: #{forward.1} parent=1 // pred_fallthru
      _
    // Predicated region
    $region70: #{forward.1} parent=1 // pred_check
      _
    $region71: #{forward.1} parent=1 // pred_check_branch
      %83 = sbr.rel (0) target = $region73
    $region72: #{forward.1} parent=1 // pred_region
      _
    $region73: #{forward.1} parent=1 // pred_fallthru
      _
    // Predicated region
    $region74: #{forward.1} parent=1 // pred_check
      _
    $region75: #{forward.1} parent=1 // pred_check_branch
      %85 = sbr.rel (0) target = $region77
    $region76: #{forward.1} parent=1 // pred_region
      _
    $region77: #{forward.1} parent=1 // pred_fallthru
      _
    // Predicated region
    $region78: #{forward.1} parent=1 // pred_check
      _
    $region79: #{forward.1} parent=1 // pred_check_branch
      %87 = sbr.rel (0) target = $region81
    $region80: #{forward.1} parent=1 // pred_region
      %89 = dma.done [#allocation3], 8192
    $region81: #{forward.1} parent=1 // pred_fallthru
      _
    // Predicated region
    $region82: #{forward.1} parent=1 // pred_check
      _
    $region83: #{forward.1} parent=1 // pred_check_branch
      %91 = sbr.rel (0) target = $region85
    $region84: #{forward.1} parent=1 // pred_region
      %93 = dma.done [#allocation5], 8192
    $region85: #{forward.1} parent=1 // pred_fallthru
      _
    %v95 = vld [vmem:[%s0] sm:$0xff]
    %v96 = vpack.c.bf16 %v95, %v95
    %v97 = vld [vmem:[%s2] sm:$0xff]
    %v98 = vld [vmem:[%s2 + $0x8] sm:$0xff]
    %v99 = vld [vmem:[%s2 + $0x10] sm:$0xff]
    %v100 = vld [vmem:[%s2 + $0x18] sm:$0xff]
    %v101 = vld [vmem:[%s2 + $0x20] sm:$0xff]
    %v102 = vld [vmem:[%s2 + $0x28] sm:$0xff]
    %v103 = vld [vmem:[%s2 + $0x30] sm:$0xff]
    %v104 = vld [vmem:[%s2 + $0x38] sm:$0xff]
    %v105 = vld [vmem:[%s2 + $0x40] sm:$0xff]
    %v106 = vld [vmem:[%s2 + $0x48] sm:$0xff]
    %v107 = vld [vmem:[%s2 + $0x50] sm:$0xff]
    %v108 = vld [vmem:[%s2 + $0x58] sm:$0xff]
    %v109 = vld [vmem:[%s2 + $0x60] sm:$0xff]
    %v110 = vld [vmem:[%s2 + $0x68] sm:$0xff]
    %v111 = vld [vmem:[%s2 + $0x70] sm:$0xff]
    %v112 = vld [vmem:[%s2 + $0x78] sm:$0xff]
    %v113 = vld [vmem:[%s3] sm:$0xf]
    %v115 = vperm.slane %v113, 0
    %v116 = vperm.slane %v113, 1
    %v117 = vperm.slane %v113, 2
    %v118 = vperm.slane %v113, 3
    %v139 = vunpack.c.l.b16 %v97
    %v140 = vunpack.c.h.b16 %v97
    %v141 = vunpack.c.l.b16 %v98
    %v142 = vunpack.c.h.b16 %v98
    %v143 = vunpack.c.l.b16 %v99
    %v144 = vunpack.c.h.b16 %v99
    %v145 = vunpack.c.l.b16 %v100
    %v146 = vunpack.c.h.b16 %v100
    %v147 = vunpack.c.l.b16 %v101
    %v148 = vunpack.c.h.b16 %v101
    %v149 = vunpack.c.l.b16 %v102
    %v150 = vunpack.c.h.b16 %v102
    %v151 = vunpack.c.l.b16 %v103
    %v152 = vunpack.c.h.b16 %v103
    %v153 = vunpack.c.l.b16 %v104
    %v154 = vunpack.c.h.b16 %v104
    %v155 = vunpack.c.l.b16 %v105
    %v156 = vunpack.c.h.b16 %v105
    %v157 = vunpack.c.l.b16 %v106
    %v158 = vunpack.c.h.b16 %v106
    %v159 = vunpack.c.l.b16 %v107
    %v160 = vunpack.c.h.b16 %v107
    %v161 = vunpack.c.l.b16 %v108
    %v162 = vunpack.c.h.b16 %v108
    %v163 = vunpack.c.l.b16 %v109
    %v164 = vunpack.c.h.b16 %v109
    %v165 = vunpack.c.l.b16 %v110
    %v166 = vunpack.c.h.b16 %v110
    %v167 = vunpack.c.l.b16 %v111
    %v168 = vunpack.c.h.b16 %v111
    %v169 = vunpack.c.l.b16 %v112
    %v170 = vunpack.c.h.b16 %v112
    %v171 = vpack.c.b16 %v143, %v139
    %v172 = vpack.c.b16 %v144, %v140
    %v173 = vpack.c.b16 %v145, %v141
    %v174 = vpack.c.b16 %v146, %v142
    %v175 = vpack.c.b16 %v151, %v147
    %v176 = vpack.c.b16 %v152, %v148
    %v177 = vpack.c.b16 %v153, %v149
    %v178 = vpack.c.b16 %v154, %v150
    %v179 = vpack.c.b16 %v159, %v155
    %v180 = vpack.c.b16 %v160, %v156
    %v181 = vpack.c.b16 %v161, %v157
    %v182 = vpack.c.b16 %v162, %v158
    %v183 = vpack.c.b16 %v167, %v163
    %v184 = vpack.c.b16 %v168, %v164
    %v185 = vpack.c.b16 %v169, %v165
    %v186 = vpack.c.b16 %v170, %v166
    %vm203 = vcmask 523264
    %v205 = vsel %vm203, %v96, 0
    %207 = vmatpush.bf16.msra.mxu0 0
    %208 = vmatpush.bf16.msra.mxu0 0
    %209 = vmatpush.bf16.msra.mxu0 0
    %210 = vmatpush.bf16.msra.mxu0 0
    %211 = vmatpush.bf16.msra.mxu0 %v183
    %212 = vmatpush.bf16.msra.mxu0 %v179
    %213 = vmatpush.bf16.msra.mxu0 %v175
    %214 = vmatpush.bf16.msra.mxu0 %v171
    %215 = vmatmul.bf16.gmra.mxu0 %v205
    %v216 = vpop.f32.mrf.mxu0
    %v217 = vadd.f32 %v115, %v216
    %v218 = vpop.f32.mrf.mxu0
    %219 = vdwg.mxu0
    %220 = vmatpush.bf16.msra.mxu0 0
    %221 = vmatpush.bf16.msra.mxu0 0
    %222 = vmatpush.bf16.msra.mxu0 0
    %223 = vmatpush.bf16.msra.mxu0 0
    %224 = vmatpush.bf16.msra.mxu0 %v184
    %225 = vmatpush.bf16.msra.mxu0 %v180
    %226 = vmatpush.bf16.msra.mxu0 %v176
    %227 = vmatpush.bf16.msra.mxu0 %v172
    %228 = vmatmul.bf16.gmra.mxu0 %v205
    %v229 = vpop.f32.mrf.mxu0
    %v230 = vadd.f32 %v116, %v229
    %v231 = vpop.f32.mrf.mxu0
    %232 = vdwg.mxu0
    %233 = vmatpush.bf16.msra.mxu0 0
    %234 = vmatpush.bf16.msra.mxu0 0
    %235 = vmatpush.bf16.msra.mxu0 0
    %236 = vmatpush.bf16.msra.mxu0 0
    %237 = vmatpush.bf16.msra.mxu0 %v185
    %238 = vmatpush.bf16.msra.mxu0 %v181
    %239 = vmatpush.bf16.msra.mxu0 %v177
    %240 = vmatpush.bf16.msra.mxu0 %v173
    %241 = vmatmul.bf16.gmra.mxu0 %v205
    %v242 = vpop.f32.mrf.mxu0
    %v243 = vadd.f32 %v117, %v242
    %v244 = vpop.f32.mrf.mxu0
    %245 = vdwg.mxu0
    %246 = vmatpush.bf16.msra.mxu0 0
    %247 = vmatpush.bf16.msra.mxu0 0
    %248 = vmatpush.bf16.msra.mxu0 0
    %249 = vmatpush.bf16.msra.mxu0 0
    %250 = vmatpush.bf16.msra.mxu0 %v186
    %251 = vmatpush.bf16.msra.mxu0 %v182
    %252 = vmatpush.bf16.msra.mxu0 %v178
    %253 = vmatpush.bf16.msra.mxu0 %v174
    %254 = vmatmul.bf16.gmra.mxu0 %v205
    %v255 = vpop.f32.mrf.mxu0
    %v256 = vadd.f32 %v118, %v255
    %v257 = vpop.f32.mrf.mxu0
    %258 = vdwg.mxu0
    %v259 = vmax.f32 %v217, 0.0
    %v260 = vmax.f32 %v230, 0.0
    %v261 = vmax.f32 %v243, 0.0
    %v262 = vmax.f32 %v256, 0.0
    %v263 = vpack.c.bf16 %v259, %v259
    %v264 = vpack.c.bf16 %v260, %v260
    %v265 = vpack.c.bf16 %v261, %v261
    %v266 = vpack.c.bf16 %v262, %v262
    %v267 = vld [vmem:[#allocation2] sm:$0xff]
    %v268 = vld [vmem:[#allocation2 + $0x8] sm:$0xff]
    %v269 = vld [vmem:[#allocation2 + $0x10] sm:$0xff]
    %v270 = vld [vmem:[#allocation2 + $0x18] sm:$0xff]
    %v271 = vld [vmem:[#allocation2 + $0x20] sm:$0xff]
    %v272 = vld [vmem:[#allocation2 + $0x28] sm:$0xff]
    %v273 = vld [vmem:[#allocation2 + $0x30] sm:$0xff]
    %v274 = vld [vmem:[#allocation2 + $0x38] sm:$0xff]
    %v275 = vld [vmem:[#allocation2 + $0x40] sm:$0xff]
    %v276 = vld [vmem:[#allocation2 + $0x48] sm:$0xff]
    %v277 = vld [vmem:[#allocation2 + $0x50] sm:$0xff]
    %v278 = vld [vmem:[#allocation2 + $0x58] sm:$0xff]
    %v279 = vld [vmem:[#allocation2 + $0x60] sm:$0xff]
    %v280 = vld [vmem:[#allocation2 + $0x68] sm:$0xff]
    %v281 = vld [vmem:[#allocation2 + $0x70] sm:$0xff]
    %v282 = vld [vmem:[#allocation2 + $0x78] sm:$0xff]
    %v283 = vld [vmem:[#allocation2 + $0x80] sm:$0xff]
    %v284 = vld [vmem:[#allocation2 + $0x88] sm:$0xff]
    %v285 = vld [vmem:[#allocation2 + $0x90] sm:$0xff]
    %v286 = vld [vmem:[#allocation2 + $0x98] sm:$0xff]
    %v287 = vld [vmem:[#allocation2 + $0xa0] sm:$0xff]
    %v288 = vld [vmem:[#allocation2 + $0xa8] sm:$0xff]
    %v289 = vld [vmem:[#allocation2 + $0xb0] sm:$0xff]
    %v290 = vld [vmem:[#allocation2 + $0xb8] sm:$0xff]
    %v291 = vld [vmem:[#allocation2 + $0xc0] sm:$0xff]
    %v292 = vld [vmem:[#allocation2 + $0xc8] sm:$0xff]
    %v293 = vld [vmem:[#allocation2 + $0xd0] sm:$0xff]
    %v294 = vld [vmem:[#allocation2 + $0xd8] sm:$0xff]
    %v295 = vld [vmem:[#allocation2 + $0xe0] sm:$0xff]
    %v296 = vld [vmem:[#allocation2 + $0xe8] sm:$0xff]
    %v297 = vld [vmem:[#allocation2 + $0xf0] sm:$0xff]
    %v298 = vld [vmem:[#allocation2 + $0xf8] sm:$0xff]
    %v299 = vld [vmem:[#allocation2 + $0x100] sm:$0xff]
    %v300 = vld [vmem:[#allocation2 + $0x108] sm:$0xff]
    %v301 = vld [vmem:[#allocation2 + $0x110] sm:$0xff]
    %v302 = vld [vmem:[#allocation2 + $0x118] sm:$0xff]
    %v303 = vld [vmem:[#allocation2 + $0x120] sm:$0xff]
    %v304 = vld [vmem:[#allocation2 + $0x128] sm:$0xff]
    %v305 = vld [vmem:[#allocation2 + $0x130] sm:$0xff]
    %v306 = vld [vmem:[#allocation2 + $0x138] sm:$0xff]
    %v307 = vld [vmem:[#allocation2 + $0x140] sm:$0xff]
    %v308 = vld [vmem:[#allocation2 + $0x148] sm:$0xff]
    %v309 = vld [vmem:[#allocation2 + $0x150] sm:$0xff]
    %v310 = vld [vmem:[#allocation2 + $0x158] sm:$0xff]
    %v311 = vld [vmem:[#allocation2 + $0x160] sm:$0xff]
    %v312 = vld [vmem:[#allocation2 + $0x168] sm:$0xff]
    %v313 = vld [vmem:[#allocation2 + $0x170] sm:$0xff]
    %v314 = vld [vmem:[#allocation2 + $0x178] sm:$0xff]
    %v315 = vld [vmem:[#allocation2 + $0x180] sm:$0xff]
    %v316 = vld [vmem:[#allocation2 + $0x188] sm:$0xff]
    %v317 = vld [vmem:[#allocation2 + $0x190] sm:$0xff]
    %v318 = vld [vmem:[#allocation2 + $0x198] sm:$0xff]
    %v319 = vld [vmem:[#allocation2 + $0x1a0] sm:$0xff]
    %v320 = vld [vmem:[#allocation2 + $0x1a8] sm:$0xff]
    %v321 = vld [vmem:[#allocation2 + $0x1b0] sm:$0xff]
    %v322 = vld [vmem:[#allocation2 + $0x1b8] sm:$0xff]
    %v323 = vld [vmem:[#allocation2 + $0x1c0] sm:$0xff]
    %v324 = vld [vmem:[#allocation2 + $0x1c8] sm:$0xff]
    %v325 = vld [vmem:[#allocation2 + $0x1d0] sm:$0xff]
    %v326 = vld [vmem:[#allocation2 + $0x1d8] sm:$0xff]
    %v327 = vld [vmem:[#allocation2 + $0x1e0] sm:$0xff]
    %v328 = vld [vmem:[#allocation2 + $0x1e8] sm:$0xff]
    %v329 = vld [vmem:[#allocation2 + $0x1f0] sm:$0xff]
    %v330 = vld [vmem:[#allocation2 + $0x1f8] sm:$0xff]
    %v331 = vld [vmem:[%s5] sm:$0x3]
    %v333 = vperm.slane %v331, 0
    %v334 = vperm.slane %v331, 1
    %v401 = vunpack.c.l.b16 %v267
    %v402 = vunpack.c.h.b16 %v267
    %v403 = vunpack.c.l.b16 %v268
    %v404 = vunpack.c.h.b16 %v268
    %v405 = vunpack.c.l.b16 %v269
    %v406 = vunpack.c.h.b16 %v269
    %v407 = vunpack.c.l.b16 %v270
    %v408 = vunpack.c.h.b16 %v270
    %v409 = vunpack.c.l.b16 %v271
    %v410 = vunpack.c.h.b16 %v271
    %v411 = vunpack.c.l.b16 %v272
    %v412 = vunpack.c.h.b16 %v272
    %v413 = vunpack.c.l.b16 %v273
    %v414 = vunpack.c.h.b16 %v273
    %v415 = vunpack.c.l.b16 %v274
    %v416 = vunpack.c.h.b16 %v274
    %v417 = vunpack.c.l.b16 %v275
    %v418 = vunpack.c.h.b16 %v275
    %v419 = vunpack.c.l.b16 %v276
    %v420 = vunpack.c.h.b16 %v276
    %v421 = vunpack.c.l.b16 %v277
    %v422 = vunpack.c.h.b16 %v277
    %v423 = vunpack.c.l.b16 %v278
    %v424 = vunpack.c.h.b16 %v278
    %v425 = vunpack.c.l.b16 %v279
    %v426 = vunpack.c.h.b16 %v279
    %v427 = vunpack.c.l.b16 %v280
    %v428 = vunpack.c.h.b16 %v280
    %v429 = vunpack.c.l.b16 %v281
    %v430 = vunpack.c.h.b16 %v281
    %v431 = vunpack.c.l.b16 %v282
    %v432 = vunpack.c.h.b16 %v282
    %v433 = vunpack.c.l.b16 %v283
    %v434 = vunpack.c.h.b16 %v283
    %v435 = vunpack.c.l.b16 %v284
    %v436 = vunpack.c.h.b16 %v284
    %v437 = vunpack.c.l.b16 %v285
    %v438 = vunpack.c.h.b16 %v285
    %v439 = vunpack.c.l.b16 %v286
    %v440 = vunpack.c.h.b16 %v286
    %v441 = vunpack.c.l.b16 %v287
    %v442 = vunpack.c.h.b16 %v287
    %v443 = vunpack.c.l.b16 %v288
    %v444 = vunpack.c.h.b16 %v288
    %v445 = vunpack.c.l.b16 %v289
    %v446 = vunpack.c.h.b16 %v289
    %v447 = vunpack.c.l.b16 %v290
    %v448 = vunpack.c.h.b16 %v290
    %v449 = vunpack.c.l.b16 %v291
    %v450 = vunpack.c.h.b16 %v291
    %v451 = vunpack.c.l.b16 %v292
    %v452 = vunpack.c.h.b16 %v292
    %v453 = vunpack.c.l.b16 %v293
    %v454 = vunpack.c.h.b16 %v293
    %v455 = vunpack.c.l.b16 %v294
    %v456 = vunpack.c.h.b16 %v294
    %v457 = vunpack.c.l.b16 %v295
    %v458 = vunpack.c.h.b16 %v295
    %v459 = vunpack.c.l.b16 %v296
    %v460 = vunpack.c.h.b16 %v296
    %v461 = vunpack.c.l.b16 %v297
    %v462 = vunpack.c.h.b16 %v297
    %v463 = vunpack.c.l.b16 %v298
    %v464 = vunpack.c.h.b16 %v298
    %v465 = vunpack.c.l.b16 %v299
    %v466 = vunpack.c.h.b16 %v299
    %v467 = vunpack.c.l.b16 %v300
    %v468 = vunpack.c.h.b16 %v300
    %v469 = vunpack.c.l.b16 %v301
    %v470 = vunpack.c.h.b16 %v301
    %v471 = vunpack.c.l.b16 %v302
    %v472 = vunpack.c.h.b16 %v302
    %v473 = vunpack.c.l.b16 %v303
    %v474 = vunpack.c.h.b16 %v303
    %v475 = vunpack.c.l.b16 %v304
    %v476 = vunpack.c.h.b16 %v304
    %v477 = vunpack.c.l.b16 %v305
    %v478 = vunpack.c.h.b16 %v305
    %v479 = vunpack.c.l.b16 %v306
    %v480 = vunpack.c.h.b16 %v306
    %v481 = vunpack.c.l.b16 %v307
    %v482 = vunpack.c.h.b16 %v307
    %v483 = vunpack.c.l.b16 %v308
    %v484 = vunpack.c.h.b16 %v308
    %v485 = vunpack.c.l.b16 %v309
    %v486 = vunpack.c.h.b16 %v309
    %v487 = vunpack.c.l.b16 %v310
    %v488 = vunpack.c.h.b16 %v310
    %v489 = vunpack.c.l.b16 %v311
    %v490 = vunpack.c.h.b16 %v311
    %v491 = vunpack.c.l.b16 %v312
    %v492 = vunpack.c.h.b16 %v312
    %v493 = vunpack.c.l.b16 %v313
    %v494 = vunpack.c.h.b16 %v313
    %v495 = vunpack.c.l.b16 %v314
    %v496 = vunpack.c.h.b16 %v314
    %v497 = vunpack.c.l.b16 %v315
    %v498 = vunpack.c.h.b16 %v315
    %v499 = vunpack.c.l.b16 %v316
    %v500 = vunpack.c.h.b16 %v316
    %v501 = vunpack.c.l.b16 %v317
    %v502 = vunpack.c.h.b16 %v317
    %v503 = vunpack.c.l.b16 %v318
    %v504 = vunpack.c.h.b16 %v318
    %v505 = vunpack.c.l.b16 %v319
    %v506 = vunpack.c.h.b16 %v319
    %v507 = vunpack.c.l.b16 %v320
    %v508 = vunpack.c.h.b16 %v320
    %v509 = vunpack.c.l.b16 %v321
    %v510 = vunpack.c.h.b16 %v321
    %v511 = vunpack.c.l.b16 %v322
    %v512 = vunpack.c.h.b16 %v322
    %v513 = vunpack.c.l.b16 %v323
    %v514 = vunpack.c.h.b16 %v323
    %v515 = vunpack.c.l.b16 %v324
    %v516 = vunpack.c.h.b16 %v324
    %v517 = vunpack.c.l.b16 %v325
    %v518 = vunpack.c.h.b16 %v325
    %v519 = vunpack.c.l.b16 %v326
    %v520 = vunpack.c.h.b16 %v326
    %v521 = vunpack.c.l.b16 %v327
    %v522 = vunpack.c.h.b16 %v327
    %v523 = vunpack.c.l.b16 %v328
    %v524 = vunpack.c.h.b16 %v328
    %v525 = vunpack.c.l.b16 %v329
    %v526 = vunpack.c.h.b16 %v329
    %v527 = vunpack.c.l.b16 %v330
    %v528 = vunpack.c.h.b16 %v330
    %v529 = vpack.c.b16 %v403, %v401
    %v530 = vpack.c.b16 %v404, %v402
    %v531 = vpack.c.b16 %v407, %v405
    %v532 = vpack.c.b16 %v408, %v406
    %v533 = vpack.c.b16 %v411, %v409
    %v534 = vpack.c.b16 %v412, %v410
    %v535 = vpack.c.b16 %v415, %v413
    %v536 = vpack.c.b16 %v416, %v414
    %v537 = vpack.c.b16 %v419, %v417
    %v538 = vpack.c.b16 %v420, %v418
    %v539 = vpack.c.b16 %v423, %v421
    %v540 = vpack.c.b16 %v424, %v422
    %v541 = vpack.c.b16 %v427, %v425
    %v542 = vpack.c.b16 %v428, %v426
    %v543 = vpack.c.b16 %v431, %v429
    %v544 = vpack.c.b16 %v432, %v430
    %v545 = vpack.c.b16 %v435, %v433
    %v546 = vpack.c.b16 %v436, %v434
    %v547 = vpack.c.b16 %v439, %v437
    %v548 = vpack.c.b16 %v440, %v438
    %v549 = vpack.c.b16 %v443, %v441
    %v550 = vpack.c.b16 %v444, %v442
    %v551 = vpack.c.b16 %v447, %v445
    %v552 = vpack.c.b16 %v448, %v446
    %v553 = vpack.c.b16 %v451, %v449
    %v554 = vpack.c.b16 %v452, %v450
    %v555 = vpack.c.b16 %v455, %v453
    %v556 = vpack.c.b16 %v456, %v454
    %v557 = vpack.c.b16 %v459, %v457
    %v558 = vpack.c.b16 %v460, %v458
    %v559 = vpack.c.b16 %v463, %v461
    %v560 = vpack.c.b16 %v464, %v462
    %v561 = vpack.c.b16 %v467, %v465
    %v562 = vpack.c.b16 %v468, %v466
    %v563 = vpack.c.b16 %v471, %v469
    %v564 = vpack.c.b16 %v472, %v470
    %v565 = vpack.c.b16 %v475, %v473
    %v566 = vpack.c.b16 %v476, %v474
    %v567 = vpack.c.b16 %v479, %v477
    %v568 = vpack.c.b16 %v480, %v478
    %v569 = vpack.c.b16 %v483, %v481
    %v570 = vpack.c.b16 %v484, %v482
    %v571 = vpack.c.b16 %v487, %v485
    %v572 = vpack.c.b16 %v488, %v486
    %v573 = vpack.c.b16 %v491, %v489
    %v574 = vpack.c.b16 %v492, %v490
    %v575 = vpack.c.b16 %v495, %v493
    %v576 = vpack.c.b16 %v496, %v494
    %v577 = vpack.c.b16 %v499, %v497
    %v578 = vpack.c.b16 %v500, %v498
    %v579 = vpack.c.b16 %v503, %v501
    %v580 = vpack.c.b16 %v504, %v502
    %v581 = vpack.c.b16 %v507, %v505
    %v582 = vpack.c.b16 %v508, %v506
    %v583 = vpack.c.b16 %v511, %v509
    %v584 = vpack.c.b16 %v512, %v510
    %v585 = vpack.c.b16 %v515, %v513
    %v586 = vpack.c.b16 %v516, %v514
    %v587 = vpack.c.b16 %v519, %v517
    %v588 = vpack.c.b16 %v520, %v518
    %v589 = vpack.c.b16 %v523, %v521
    %v590 = vpack.c.b16 %v524, %v522
    %v591 = vpack.c.b16 %v527, %v525
    %v592 = vpack.c.b16 %v528, %v526
    %657 = vmatpush.bf16.msra.mxu0 %v543
    %658 = vmatpush.bf16.msra.mxu0 %v541
    %659 = vmatpush.bf16.msra.mxu0 %v539
    %660 = vmatpush.bf16.msra.mxu0 %v537
    %661 = vmatpush.bf16.msra.mxu0 %v535
    %662 = vmatpush.bf16.msra.mxu0 %v533
    %663 = vmatpush.bf16.msra.mxu0 %v531
    %664 = vmatpush.bf16.msra.mxu0 %v529
    %665 = vmatmul.bf16.gmra.mxu0 %v263
    %v666 = vpop.f32.mrf.mxu0
    %v667 = vadd.f32 %v333, %v666
    %v668 = vpop.f32.mrf.mxu0
    %669 = vdwg.mxu0
    %670 = vmatpush.bf16.msra.mxu0 %v559
    %671 = vmatpush.bf16.msra.mxu0 %v557
    %672 = vmatpush.bf16.msra.mxu0 %v555
    %673 = vmatpush.bf16.msra.mxu0 %v553
    %674 = vmatpush.bf16.msra.mxu0 %v551
    %675 = vmatpush.bf16.msra.mxu0 %v549
    %676 = vmatpush.bf16.msra.mxu0 %v547
    %677 = vmatpush.bf16.msra.mxu0 %v545
    %678 = vmatmul.bf16.gmra.mxu0 %v264
    %v679 = vpop.f32.mrf.mxu0
    %v680 = vadd.f32 %v667, %v679
    %v681 = vpop.f32.mrf.mxu0
    %682 = vdwg.mxu0
    %683 = vmatpush.bf16.msra.mxu0 %v575
    %684 = vmatpush.bf16.msra.mxu0 %v573
    %685 = vmatpush.bf16.msra.mxu0 %v571
    %686 = vmatpush.bf16.msra.mxu0 %v569
    %687 = vmatpush.bf16.msra.mxu0 %v567
    %688 = vmatpush.bf16.msra.mxu0 %v565
    %689 = vmatpush.bf16.msra.mxu0 %v563
    %690 = vmatpush.bf16.msra.mxu0 %v561
    %691 = vmatmul.bf16.gmra.mxu0 %v265
    %v692 = vpop.f32.mrf.mxu0
    %v693 = vadd.f32 %v680, %v692
    %v694 = vpop.f32.mrf.mxu0
    %695 = vdwg.mxu0
    %696 = vmatpush.bf16.msra.mxu0 %v591
    %697 = vmatpush.bf16.msra.mxu0 %v589
    %698 = vmatpush.bf16.msra.mxu0 %v587
    %699 = vmatpush.bf16.msra.mxu0 %v585
    %700 = vmatpush.bf16.msra.mxu0 %v583
    %701 = vmatpush.bf16.msra.mxu0 %v581
    %702 = vmatpush.bf16.msra.mxu0 %v579
    %703 = vmatpush.bf16.msra.mxu0 %v577
    %704 = vmatmul.bf16.gmra.mxu0 %v266
    %v705 = vpop.f32.mrf.mxu0
    %v706 = vadd.f32 %v693, %v705
    %v707 = vpop.f32.mrf.mxu0
    %708 = vdwg.mxu0
    %709 = vmatpush.bf16.msra.mxu0 %v544
    %710 = vmatpush.bf16.msra.mxu0 %v542
    %711 = vmatpush.bf16.msra.mxu0 %v540
    %712 = vmatpush.bf16.msra.mxu0 %v538
    %713 = vmatpush.bf16.msra.mxu0 %v536
    %714 = vmatpush.bf16.msra.mxu0 %v534
    %715 = vmatpush.bf16.msra.mxu0 %v532
    %716 = vmatpush.bf16.msra.mxu0 %v530
    %717 = vmatmul.bf16.gmra.mxu0 %v263
    %v718 = vpop.f32.mrf.mxu0
    %v719 = vadd.f32 %v334, %v718
    %v720 = vpop.f32.mrf.mxu0
    %721 = vdwg.mxu0
    %722 = vmatpush.bf16.msra.mxu0 %v560
    %723 = vmatpush.bf16.msra.mxu0 %v558
    %724 = vmatpush.bf16.msra.mxu0 %v556
    %725 = vmatpush.bf16.msra.mxu0 %v554
    %726 = vmatpush.bf16.msra.mxu0 %v552
    %727 = vmatpush.bf16.msra.mxu0 %v550
    %728 = vmatpush.bf16.msra.mxu0 %v548
    %729 = vmatpush.bf16.msra.mxu0 %v546
    %730 = vmatmul.bf16.gmra.mxu0 %v264
    %v731 = vpop.f32.mrf.mxu0
    %v732 = vadd.f32 %v719, %v731
    %v733 = vpop.f32.mrf.mxu0
    %734 = vdwg.mxu0
    %735 = vmatpush.bf16.msra.mxu0 %v576
    %736 = vmatpush.bf16.msra.mxu0 %v574
    %737 = vmatpush.bf16.msra.mxu0 %v572
    %738 = vmatpush.bf16.msra.mxu0 %v570
    %739 = vmatpush.bf16.msra.mxu0 %v568
    %740 = vmatpush.bf16.msra.mxu0 %v566
    %741 = vmatpush.bf16.msra.mxu0 %v564
    %742 = vmatpush.bf16.msra.mxu0 %v562
    %743 = vmatmul.bf16.gmra.mxu0 %v265
    %v744 = vpop.f32.mrf.mxu0
    %v745 = vadd.f32 %v732, %v744
    %v746 = vpop.f32.mrf.mxu0
    %747 = vdwg.mxu0
    %748 = vmatpush.bf16.msra.mxu0 %v592
    %749 = vmatpush.bf16.msra.mxu0 %v590
    %750 = vmatpush.bf16.msra.mxu0 %v588
    %751 = vmatpush.bf16.msra.mxu0 %v586
    %752 = vmatpush.bf16.msra.mxu0 %v584
    %753 = vmatpush.bf16.msra.mxu0 %v582
    %754 = vmatpush.bf16.msra.mxu0 %v580
    %755 = vmatpush.bf16.msra.mxu0 %v578
    %756 = vmatmul.bf16.gmra.mxu0 %v266
    %v757 = vpop.f32.mrf.mxu0
    %v758 = vadd.f32 %v745, %v757
    %v759 = vpop.f32.mrf.mxu0
    %760 = vdwg.mxu0
    %v761 = vmax.f32 %v706, 0.0
    %v762 = vmax.f32 %v758, 0.0
    %v763 = vpack.c.bf16 %v761, %v761
    %v764 = vpack.c.bf16 %v762, %v762
    %v765 = vld [vmem:[%s6] sm:$0xf]
    %v766 = vld [vmem:[%s6 + $0x4] sm:$0xf]
    %v767 = vld [vmem:[%s6 + $0x8] sm:$0xf]
    %v768 = vld [vmem:[%s6 + $0xc] sm:$0xf]
    %v769 = vld [vmem:[%s6 + $0x10] sm:$0xf]
    %v770 = vld [vmem:[%s6 + $0x14] sm:$0xf]
    %v771 = vld [vmem:[%s6 + $0x18] sm:$0xf]
    %v772 = vld [vmem:[%s6 + $0x1c] sm:$0xf]
    %v773 = vld [vmem:[%s6 + $0x20] sm:$0xf]
    %v774 = vld [vmem:[%s6 + $0x24] sm:$0xf]
    %v775 = vld [vmem:[%s6 + $0x28] sm:$0xf]
    %v776 = vld [vmem:[%s6 + $0x2c] sm:$0xf]
    %v777 = vld [vmem:[%s6 + $0x30] sm:$0xf]
    %v778 = vld [vmem:[%s6 + $0x34] sm:$0xf]
    %v779 = vld [vmem:[%s6 + $0x38] sm:$0xf]
    %v780 = vld [vmem:[%s6 + $0x3c] sm:$0xf]
    %v781 = vld [vmem:[%s6 + $0x40] sm:$0xf]
    %v782 = vld [vmem:[%s6 + $0x44] sm:$0xf]
    %v783 = vld [vmem:[%s6 + $0x48] sm:$0xf]
    %v784 = vld [vmem:[%s6 + $0x4c] sm:$0xf]
    %v785 = vld [vmem:[%s6 + $0x50] sm:$0xf]
    %v786 = vld [vmem:[%s6 + $0x54] sm:$0xf]
    %v787 = vld [vmem:[%s6 + $0x58] sm:$0xf]
    %v788 = vld [vmem:[%s6 + $0x5c] sm:$0xf]
    %v789 = vld [vmem:[%s6 + $0x60] sm:$0xf]
    %v790 = vld [vmem:[%s6 + $0x64] sm:$0xf]
    %v791 = vld [vmem:[%s6 + $0x68] sm:$0xf]
    %v792 = vld [vmem:[%s6 + $0x6c] sm:$0xf]
    %v793 = vld [vmem:[%s6 + $0x70] sm:$0xf]
    %v794 = vld [vmem:[%s6 + $0x74] sm:$0xf]
    %v795 = vld [vmem:[%s6 + $0x78] sm:$0xf]
    %v796 = vld [vmem:[%s6 + $0x7c] sm:$0xf]
    %v797 = vld [vmem:[%s7] sm:$0x1]
    %v799 = vperm.slane %v797, 0
    %v833 = vunpack.c.l.b16 %v765
    %v834 = vunpack.c.l.b16 %v766
    %v835 = vunpack.c.l.b16 %v767
    %v836 = vunpack.c.l.b16 %v768
    %v837 = vunpack.c.l.b16 %v769
    %v838 = vunpack.c.l.b16 %v770
    %v839 = vunpack.c.l.b16 %v771
    %v840 = vunpack.c.l.b16 %v772
    %v841 = vunpack.c.l.b16 %v773
    %v842 = vunpack.c.l.b16 %v774
    %v843 = vunpack.c.l.b16 %v775
    %v844 = vunpack.c.l.b16 %v776
    %v845 = vunpack.c.l.b16 %v777
    %v846 = vunpack.c.l.b16 %v778
    %v847 = vunpack.c.l.b16 %v779
    %v848 = vunpack.c.l.b16 %v780
    %v849 = vunpack.c.l.b16 %v781
    %v850 = vunpack.c.l.b16 %v782
    %v851 = vunpack.c.l.b16 %v783
    %v852 = vunpack.c.l.b16 %v784
    %v853 = vunpack.c.l.b16 %v785
    %v854 = vunpack.c.l.b16 %v786
    %v855 = vunpack.c.l.b16 %v787
    %v856 = vunpack.c.l.b16 %v788
    %v857 = vunpack.c.l.b16 %v789
    %v858 = vunpack.c.l.b16 %v790
    %v859 = vunpack.c.l.b16 %v791
    %v860 = vunpack.c.l.b16 %v792
    %v861 = vunpack.c.l.b16 %v793
    %v862 = vunpack.c.l.b16 %v794
    %v863 = vunpack.c.l.b16 %v795
    %v864 = vunpack.c.l.b16 %v796
    %v865 = vpack.c.b16 %v834, %v833
    %v866 = vpack.c.b16 %v836, %v835
    %v867 = vpack.c.b16 %v838, %v837
    %v868 = vpack.c.b16 %v840, %v839
    %v869 = vpack.c.b16 %v842, %v841
    %v870 = vpack.c.b16 %v844, %v843
    %v871 = vpack.c.b16 %v846, %v845
    %v872 = vpack.c.b16 %v848, %v847
    %v873 = vpack.c.b16 %v850, %v849
    %v874 = vpack.c.b16 %v852, %v851
    %v875 = vpack.c.b16 %v854, %v853
    %v876 = vpack.c.b16 %v856, %v855
    %v877 = vpack.c.b16 %v858, %v857
    %v878 = vpack.c.b16 %v860, %v859
    %v879 = vpack.c.b16 %v862, %v861
    %v880 = vpack.c.b16 %v864, %v863
    %897 = vmatpush.bf16.msra.mxu0 %v872
    %898 = vmatpush.bf16.msra.mxu0 %v871
    %899 = vmatpush.bf16.msra.mxu0 %v870
    %900 = vmatpush.bf16.msra.mxu0 %v869
    %901 = vmatpush.bf16.msra.mxu0 %v868
    %902 = vmatpush.bf16.msra.mxu0 %v867
    %903 = vmatpush.bf16.msra.mxu0 %v866
    %904 = vmatpush.bf16.msra.mxu0 %v865
    %905 = vmatmul.bf16.gmra.mxu0 %v763
    %v906 = vpop.f32.mrf.mxu0
    %v907 = vadd.f32 %v799, %v906
    %v908 = vpop.f32.mrf.mxu0
    %909 = vdwg.mxu0
    %910 = vmatpush.bf16.msra.mxu0 %v880
    %911 = vmatpush.bf16.msra.mxu0 %v879
    %912 = vmatpush.bf16.msra.mxu0 %v878
    %913 = vmatpush.bf16.msra.mxu0 %v877
    %914 = vmatpush.bf16.msra.mxu0 %v876
    %915 = vmatpush.bf16.msra.mxu0 %v875
    %916 = vmatpush.bf16.msra.mxu0 %v874
    %917 = vmatpush.bf16.msra.mxu0 %v873
    %918 = vmatmul.bf16.gmra.mxu0 %v764
    %v919 = vpop.f32.mrf.mxu0
    %v920 = vadd.f32 %v907, %v919
    %v921 = vpop.f32.mrf.mxu0
    %922 = vdwg.mxu0
    %v923 = vmax.f32 %v920, 0.0
    %v924 = vpack.c.bf16 %v923, %v923
    %v925 = vld [vmem:[%s8] sm:$0xf]
    %v926 = vld [vmem:[%s8 + $0x4] sm:$0xf]
    %v927 = vld [vmem:[%s8 + $0x8] sm:$0xf]
    %v928 = vld [vmem:[%s8 + $0xc] sm:$0xf]
    %v929 = vld [vmem:[%s8 + $0x10] sm:$0xf]
    %v930 = vld [vmem:[%s8 + $0x14] sm:$0xf]
    %v931 = vld [vmem:[%s8 + $0x18] sm:$0xf]
    %v932 = vld [vmem:[%s8 + $0x1c] sm:$0xf]
    %v933 = vld [vmem:[%s9] sm:$0x1]
    %v935 = vperm.slane %v933, 0
    %v945 = vunpack.c.l.b16 %v925
    %v946 = vunpack.c.l.b16 %v926
    %v947 = vunpack.c.l.b16 %v927
    %v948 = vunpack.c.l.b16 %v928
    %v949 = vunpack.c.l.b16 %v929
    %v950 = vunpack.c.l.b16 %v930
    %v951 = vunpack.c.l.b16 %v931
    %v952 = vunpack.c.l.b16 %v932
    %v953 = vpack.c.b16 %v946, %v945
    %v954 = vpack.c.b16 %v948, %v947
    %v955 = vpack.c.b16 %v950, %v949
    %v956 = vpack.c.b16 %v952, %v951
    %v962 = vsel %vm203, %v924, 0
    %964 = vmatpush.bf16.msra.mxu0 0
    %965 = vmatpush.bf16.msra.mxu0 0
    %966 = vmatpush.bf16.msra.mxu0 0
    %967 = vmatpush.bf16.msra.mxu0 0
    %968 = vmatpush.bf16.msra.mxu0 %v956
    %969 = vmatpush.bf16.msra.mxu0 %v955
    %970 = vmatpush.bf16.msra.mxu0 %v954
    %971 = vmatpush.bf16.msra.mxu0 %v953
    %972 = vmatmul.bf16.gmra.mxu0 %v962
    %v973 = vpop.f32.mrf.mxu0
    %v974 = vadd.f32 %v935, %v973
    %v975 = vpop.f32.mrf.mxu0
    %976 = vdwg.mxu0
    %v977 = vld [vmem:[%s1] sm:$0xff]
    %v978 = vpack.c.bf16 %v974, %v974
    %v979 = vld [vmem:[%s10] sm:$0xf]
    %v980 = vld [vmem:[%s10 + $0x4] sm:$0xf]
    %v981 = vld [vmem:[%s11] sm:$0x1]
    %983 = vset.pattern.permute.xlu0 0
    %984 = vperm.xlu0 %983, %v977
    %v985 = vpop.permute.xlu0 %984
    %v988 = vperm.slane %v981, 0
    %v990 = vmul.f32 %v985, %v988
    %v993 = vunpack.c.l.b16 %v979
    %v994 = vunpack.c.l.b16 %v980
    %v995 = vpack.c.b16 %v994, %v993
    %vm997 = vcmask 130048
    %v999 = vsel %vm997, %v978, 0
    %1001 = vmatpush.bf16.msra.mxu0 0
    %1002 = vmatpush.bf16.msra.mxu0 0
    %1003 = vmatpush.bf16.msra.mxu0 0
    %1004 = vmatpush.bf16.msra.mxu0 0
    %1005 = vmatpush.bf16.msra.mxu0 0
    %1006 = vmatpush.bf16.msra.mxu0 0
    %1007 = vmatpush.bf16.msra.mxu0 0
    %1008 = vmatpush.bf16.msra.mxu0 %v995
    %1009 = vmatmul.bf16.gmra.mxu0 %v999
    %v1010 = vpop.f32.mrf.mxu0
    %v1011 = vadd.f32 %v990, %v1010
    %v1012 = vpop.f32.mrf.mxu0
    %1013 = vdwg.mxu0
    %v1014 = vld [vmem:[%s12] sm:$0x1]
    %v1016 = vperm.slane %v1014, 0
    %v1018 = vadd.f32 %v1011, %v1016
    %v1019 = vmax.f32 %v1018, 0.0
    %v1020 = vpack.c.bf16 %v1019, %v1019
    %v1021 = vld [vmem:[%s13] sm:$0xff]
    %v1022 = vld [vmem:[%s13 + $0x8] sm:$0xff]
    %v1023 = vld [vmem:[%s13 + $0x10] sm:$0xff]
    %v1024 = vld [vmem:[%s13 + $0x18] sm:$0xff]
    %v1025 = vld [vmem:[%s13 + $0x20] sm:$0xff]
    %v1026 = vld [vmem:[%s13 + $0x28] sm:$0xff]
    %v1027 = vld [vmem:[%s13 + $0x30] sm:$0xff]
    %v1028 = vld [vmem:[%s13 + $0x38] sm:$0xff]
    %v1029 = vld [vmem:[%s14] sm:$0x3]
    %v1031 = vperm.slane %v1029, 0
    %v1032 = vperm.slane %v1029, 1
    %v1043 = vunpack.c.l.b16 %v1021
    %v1044 = vunpack.c.h.b16 %v1021
    %v1045 = vunpack.c.l.b16 %v1022
    %v1046 = vunpack.c.h.b16 %v1022
    %v1047 = vunpack.c.l.b16 %v1023
    %v1048 = vunpack.c.h.b16 %v1023
    %v1049 = vunpack.c.l.b16 %v1024
    %v1050 = vunpack.c.h.b16 %v1024
    %v1051 = vunpack.c.l.b16 %v1025
    %v1052 = vunpack.c.h.b16 %v1025
    %v1053 = vunpack.c.l.b16 %v1026
    %v1054 = vunpack.c.h.b16 %v1026
    %v1055 = vunpack.c.l.b16 %v1027
    %v1056 = vunpack.c.h.b16 %v1027
    %v1057 = vunpack.c.l.b16 %v1028
    %v1058 = vunpack.c.h.b16 %v1028
    %v1059 = vpack.c.b16 %v1045, %v1043
    %v1060 = vpack.c.b16 %v1046, %v1044
    %v1061 = vpack.c.b16 %v1049, %v1047
    %v1062 = vpack.c.b16 %v1050, %v1048
    %v1063 = vpack.c.b16 %v1053, %v1051
    %v1064 = vpack.c.b16 %v1054, %v1052
    %v1065 = vpack.c.b16 %v1057, %v1055
    %v1066 = vpack.c.b16 %v1058, %v1056
    %v1076 = vsel %vm203, %v1020, 0
    %1078 = vmatpush.bf16.msra.mxu0 0
    %1079 = vmatpush.bf16.msra.mxu0 0
    %1080 = vmatpush.bf16.msra.mxu0 0
    %1081 = vmatpush.bf16.msra.mxu0 0
    %1082 = vmatpush.bf16.msra.mxu0 %v1065
    %1083 = vmatpush.bf16.msra.mxu0 %v1063
    %1084 = vmatpush.bf16.msra.mxu0 %v1061
    %1085 = vmatpush.bf16.msra.mxu0 %v1059
    %1086 = vmatmul.bf16.gmra.mxu0 %v1076
    %v1087 = vpop.f32.mrf.mxu0
    %v1088 = vadd.f32 %v1031, %v1087
    %v1089 = vpop.f32.mrf.mxu0
    %1090 = vdwg.mxu0
    %1091 = vmatpush.bf16.msra.mxu0 0
    %1092 = vmatpush.bf16.msra.mxu0 0
    %1093 = vmatpush.bf16.msra.mxu0 0
    %1094 = vmatpush.bf16.msra.mxu0 0
    %1095 = vmatpush.bf16.msra.mxu0 %v1066
    %1096 = vmatpush.bf16.msra.mxu0 %v1064
    %1097 = vmatpush.bf16.msra.mxu0 %v1062
    %1098 = vmatpush.bf16.msra.mxu0 %v1060
    %1099 = vmatmul.bf16.gmra.mxu0 %v1076
    %v1100 = vpop.f32.mrf.mxu0
    %v1101 = vadd.f32 %v1032, %v1100
    %v1102 = vpop.f32.mrf.mxu0
    %1103 = vdwg.mxu0
    %v1104 = vmax.f32 %v1088, 0.0
    %v1105 = vmax.f32 %v1101, 0.0
    %v1106 = vpack.c.bf16 %v1104, %v1104
    %v1107 = vpack.c.bf16 %v1105, %v1105
    %v1108 = vld [vmem:[#allocation4] sm:$0xff]
    %v1109 = vld [vmem:[#allocation4 + $0x8] sm:$0xff]
    %v1110 = vld [vmem:[#allocation4 + $0x10] sm:$0xff]
    %v1111 = vld [vmem:[#allocation4 + $0x18] sm:$0xff]
    %v1112 = vld [vmem:[#allocation4 + $0x20] sm:$0xff]
    %v1113 = vld [vmem:[#allocation4 + $0x28] sm:$0xff]
    %v1114 = vld [vmem:[#allocation4 + $0x30] sm:$0xff]
    %v1115 = vld [vmem:[#allocation4 + $0x38] sm:$0xff]
    %v1116 = vld [vmem:[#allocation4 + $0x40] sm:$0xff]
    %v1117 = vld [vmem:[#allocation4 + $0x48] sm:$0xff]
    %v1118 = vld [vmem:[#allocation4 + $0x50] sm:$0xff]
    %v1119 = vld [vmem:[#allocation4 + $0x58] sm:$0xff]
    %v1120 = vld [vmem:[#allocation4 + $0x60] sm:$0xff]
    %v1121 = vld [vmem:[#allocation4 + $0x68] sm:$0xff]
    %v1122 = vld [vmem:[#allocation4 + $0x70] sm:$0xff]
    %v1123 = vld [vmem:[#allocation4 + $0x78] sm:$0xff]
    %v1124 = vld [vmem:[#allocation4 + $0x80] sm:$0xff]
    %v1125 = vld [vmem:[#allocation4 + $0x88] sm:$0xff]
    %v1126 = vld [vmem:[#allocation4 + $0x90] sm:$0xff]
    %v1127 = vld [vmem:[#allocation4 + $0x98] sm:$0xff]
    %v1128 = vld [vmem:[#allocation4 + $0xa0] sm:$0xff]
    %v1129 = vld [vmem:[#allocation4 + $0xa8] sm:$0xff]
    %v1130 = vld [vmem:[#allocation4 + $0xb0] sm:$0xff]
    %v1131 = vld [vmem:[#allocation4 + $0xb8] sm:$0xff]
    %v1132 = vld [vmem:[#allocation4 + $0xc0] sm:$0xff]
    %v1133 = vld [vmem:[#allocation4 + $0xc8] sm:$0xff]
    %v1134 = vld [vmem:[#allocation4 + $0xd0] sm:$0xff]
    %v1135 = vld [vmem:[#allocation4 + $0xd8] sm:$0xff]
    %v1136 = vld [vmem:[#allocation4 + $0xe0] sm:$0xff]
    %v1137 = vld [vmem:[#allocation4 + $0xe8] sm:$0xff]
    %v1138 = vld [vmem:[#allocation4 + $0xf0] sm:$0xff]
    %v1139 = vld [vmem:[#allocation4 + $0xf8] sm:$0xff]
    %v1140 = vld [vmem:[#allocation4 + $0x100] sm:$0xff]
    %v1141 = vld [vmem:[#allocation4 + $0x108] sm:$0xff]
    %v1142 = vld [vmem:[#allocation4 + $0x110] sm:$0xff]
    %v1143 = vld [vmem:[#allocation4 + $0x118] sm:$0xff]
    %v1144 = vld [vmem:[#allocation4 + $0x120] sm:$0xff]
    %v1145 = vld [vmem:[#allocation4 + $0x128] sm:$0xff]
    %v1146 = vld [vmem:[#allocation4 + $0x130] sm:$0xff]
    %v1147 = vld [vmem:[#allocation4 + $0x138] sm:$0xff]
    %v1148 = vld [vmem:[#allocation4 + $0x140] sm:$0xff]
    %v1149 = vld [vmem:[#allocation4 + $0x148] sm:$0xff]
    %v1150 = vld [vmem:[#allocation4 + $0x150] sm:$0xff]
    %v1151 = vld [vmem:[#allocation4 + $0x158] sm:$0xff]
    %v1152 = vld [vmem:[#allocation4 + $0x160] sm:$0xff]
    %v1153 = vld [vmem:[#allocation4 + $0x168] sm:$0xff]
    %v1154 = vld [vmem:[#allocation4 + $0x170] sm:$0xff]
    %v1155 = vld [vmem:[#allocation4 + $0x178] sm:$0xff]
    %v1156 = vld [vmem:[#allocation4 + $0x180] sm:$0xff]
    %v1157 = vld [vmem:[#allocation4 + $0x188] sm:$0xff]
    %v1158 = vld [vmem:[#allocation4 + $0x190] sm:$0xff]
    %v1159 = vld [vmem:[#allocation4 + $0x198] sm:$0xff]
    %v1160 = vld [vmem:[#allocation4 + $0x1a0] sm:$0xff]
    %v1161 = vld [vmem:[#allocation4 + $0x1a8] sm:$0xff]
    %v1162 = vld [vmem:[#allocation4 + $0x1b0] sm:$0xff]
    %v1163 = vld [vmem:[#allocation4 + $0x1b8] sm:$0xff]
    %v1164 = vld [vmem:[#allocation4 + $0x1c0] sm:$0xff]
    %v1165 = vld [vmem:[#allocation4 + $0x1c8] sm:$0xff]
    %v1166 = vld [vmem:[#allocation4 + $0x1d0] sm:$0xff]
    %v1167 = vld [vmem:[#allocation4 + $0x1d8] sm:$0xff]
    %v1168 = vld [vmem:[#allocation4 + $0x1e0] sm:$0xff]
    %v1169 = vld [vmem:[#allocation4 + $0x1e8] sm:$0xff]
    %v1170 = vld [vmem:[#allocation4 + $0x1f0] sm:$0xff]
    %v1171 = vld [vmem:[#allocation4 + $0x1f8] sm:$0xff]
    %v1172 = vld [vmem:[%s16] sm:$0xf]
    %v1174 = vperm.slane %v1172, 0
    %v1175 = vperm.slane %v1172, 1
    %v1176 = vperm.slane %v1172, 2
    %v1177 = vperm.slane %v1172, 3
    %v1246 = vunpack.c.l.b16 %v1108
    %v1247 = vunpack.c.h.b16 %v1108
    %v1248 = vunpack.c.l.b16 %v1109
    %v1249 = vunpack.c.h.b16 %v1109
    %v1250 = vunpack.c.l.b16 %v1110
    %v1251 = vunpack.c.h.b16 %v1110
    %v1252 = vunpack.c.l.b16 %v1111
    %v1253 = vunpack.c.h.b16 %v1111
    %v1254 = vunpack.c.l.b16 %v1112
    %v1255 = vunpack.c.h.b16 %v1112
    %v1256 = vunpack.c.l.b16 %v1113
    %v1257 = vunpack.c.h.b16 %v1113
    %v1258 = vunpack.c.l.b16 %v1114
    %v1259 = vunpack.c.h.b16 %v1114
    %v1260 = vunpack.c.l.b16 %v1115
    %v1261 = vunpack.c.h.b16 %v1115
    %v1262 = vunpack.c.l.b16 %v1116
    %v1263 = vunpack.c.h.b16 %v1116
    %v1264 = vunpack.c.l.b16 %v1117
    %v1265 = vunpack.c.h.b16 %v1117
    %v1266 = vunpack.c.l.b16 %v1118
    %v1267 = vunpack.c.h.b16 %v1118
    %v1268 = vunpack.c.l.b16 %v1119
    %v1269 = vunpack.c.h.b16 %v1119
    %v1270 = vunpack.c.l.b16 %v1120
    %v1271 = vunpack.c.h.b16 %v1120
    %v1272 = vunpack.c.l.b16 %v1121
    %v1273 = vunpack.c.h.b16 %v1121
    %v1274 = vunpack.c.l.b16 %v1122
    %v1275 = vunpack.c.h.b16 %v1122
    %v1276 = vunpack.c.l.b16 %v1123
    %v1277 = vunpack.c.h.b16 %v1123
    %v1278 = vunpack.c.l.b16 %v1124
    %v1279 = vunpack.c.h.b16 %v1124
    %v1280 = vunpack.c.l.b16 %v1125
    %v1281 = vunpack.c.h.b16 %v1125
    %v1282 = vunpack.c.l.b16 %v1126
    %v1283 = vunpack.c.h.b16 %v1126
    %v1284 = vunpack.c.l.b16 %v1127
    %v1285 = vunpack.c.h.b16 %v1127
    %v1286 = vunpack.c.l.b16 %v1128
    %v1287 = vunpack.c.h.b16 %v1128
    %v1288 = vunpack.c.l.b16 %v1129
    %v1289 = vunpack.c.h.b16 %v1129
    %v1290 = vunpack.c.l.b16 %v1130
    %v1291 = vunpack.c.h.b16 %v1130
    %v1292 = vunpack.c.l.b16 %v1131
    %v1293 = vunpack.c.h.b16 %v1131
    %v1294 = vunpack.c.l.b16 %v1132
    %v1295 = vunpack.c.h.b16 %v1132
    %v1296 = vunpack.c.l.b16 %v1133
    %v1297 = vunpack.c.h.b16 %v1133
    %v1298 = vunpack.c.l.b16 %v1134
    %v1299 = vunpack.c.h.b16 %v1134
    %v1300 = vunpack.c.l.b16 %v1135
    %v1301 = vunpack.c.h.b16 %v1135
    %v1302 = vunpack.c.l.b16 %v1136
    %v1303 = vunpack.c.h.b16 %v1136
    %v1304 = vunpack.c.l.b16 %v1137
    %v1305 = vunpack.c.h.b16 %v1137
    %v1306 = vunpack.c.l.b16 %v1138
    %v1307 = vunpack.c.h.b16 %v1138
    %v1308 = vunpack.c.l.b16 %v1139
    %v1309 = vunpack.c.h.b16 %v1139
    %v1310 = vunpack.c.l.b16 %v1140
    %v1311 = vunpack.c.h.b16 %v1140
    %v1312 = vunpack.c.l.b16 %v1141
    %v1313 = vunpack.c.h.b16 %v1141
    %v1314 = vunpack.c.l.b16 %v1142
    %v1315 = vunpack.c.h.b16 %v1142
    %v1316 = vunpack.c.l.b16 %v1143
    %v1317 = vunpack.c.h.b16 %v1143
    %v1318 = vunpack.c.l.b16 %v1144
    %v1319 = vunpack.c.h.b16 %v1144
    %v1320 = vunpack.c.l.b16 %v1145
    %v1321 = vunpack.c.h.b16 %v1145
    %v1322 = vunpack.c.l.b16 %v1146
    %v1323 = vunpack.c.h.b16 %v1146
    %v1324 = vunpack.c.l.b16 %v1147
    %v1325 = vunpack.c.h.b16 %v1147
    %v1326 = vunpack.c.l.b16 %v1148
    %v1327 = vunpack.c.h.b16 %v1148
    %v1328 = vunpack.c.l.b16 %v1149
    %v1329 = vunpack.c.h.b16 %v1149
    %v1330 = vunpack.c.l.b16 %v1150
    %v1331 = vunpack.c.h.b16 %v1150
    %v1332 = vunpack.c.l.b16 %v1151
    %v1333 = vunpack.c.h.b16 %v1151
    %v1334 = vunpack.c.l.b16 %v1152
    %v1335 = vunpack.c.h.b16 %v1152
    %v1336 = vunpack.c.l.b16 %v1153
    %v1337 = vunpack.c.h.b16 %v1153
    %v1338 = vunpack.c.l.b16 %v1154
    %v1339 = vunpack.c.h.b16 %v1154
    %v1340 = vunpack.c.l.b16 %v1155
    %v1341 = vunpack.c.h.b16 %v1155
    %v1342 = vunpack.c.l.b16 %v1156
    %v1343 = vunpack.c.h.b16 %v1156
    %v1344 = vunpack.c.l.b16 %v1157
    %v1345 = vunpack.c.h.b16 %v1157
    %v1346 = vunpack.c.l.b16 %v1158
    %v1347 = vunpack.c.h.b16 %v1158
    %v1348 = vunpack.c.l.b16 %v1159
    %v1349 = vunpack.c.h.b16 %v1159
    %v1350 = vunpack.c.l.b16 %v1160
    %v1351 = vunpack.c.h.b16 %v1160
    %v1352 = vunpack.c.l.b16 %v1161
    %v1353 = vunpack.c.h.b16 %v1161
    %v1354 = vunpack.c.l.b16 %v1162
    %v1355 = vunpack.c.h.b16 %v1162
    %v1356 = vunpack.c.l.b16 %v1163
    %v1357 = vunpack.c.h.b16 %v1163
    %v1358 = vunpack.c.l.b16 %v1164
    %v1359 = vunpack.c.h.b16 %v1164
    %v1360 = vunpack.c.l.b16 %v1165
    %v1361 = vunpack.c.h.b16 %v1165
    %v1362 = vunpack.c.l.b16 %v1166
    %v1363 = vunpack.c.h.b16 %v1166
    %v1364 = vunpack.c.l.b16 %v1167
    %v1365 = vunpack.c.h.b16 %v1167
    %v1366 = vunpack.c.l.b16 %v1168
    %v1367 = vunpack.c.h.b16 %v1168
    %v1368 = vunpack.c.l.b16 %v1169
    %v1369 = vunpack.c.h.b16 %v1169
    %v1370 = vunpack.c.l.b16 %v1170
    %v1371 = vunpack.c.h.b16 %v1170
    %v1372 = vunpack.c.l.b16 %v1171
    %v1373 = vunpack.c.h.b16 %v1171
    %v1374 = vpack.c.b16 %v1250, %v1246
    %v1375 = vpack.c.b16 %v1251, %v1247
    %v1376 = vpack.c.b16 %v1252, %v1248
    %v1377 = vpack.c.b16 %v1253, %v1249
    %v1378 = vpack.c.b16 %v1258, %v1254
    %v1379 = vpack.c.b16 %v1259, %v1255
    %v1380 = vpack.c.b16 %v1260, %v1256
    %v1381 = vpack.c.b16 %v1261, %v1257
    %v1382 = vpack.c.b16 %v1266, %v1262
    %v1383 = vpack.c.b16 %v1267, %v1263
    %v1384 = vpack.c.b16 %v1268, %v1264
    %v1385 = vpack.c.b16 %v1269, %v1265
    %v1386 = vpack.c.b16 %v1274, %v1270
    %v1387 = vpack.c.b16 %v1275, %v1271
    %v1388 = vpack.c.b16 %v1276, %v1272
    %v1389 = vpack.c.b16 %v1277, %v1273
    %v1390 = vpack.c.b16 %v1282, %v1278
    %v1391 = vpack.c.b16 %v1283, %v1279
    %v1392 = vpack.c.b16 %v1284, %v1280
    %v1393 = vpack.c.b16 %v1285, %v1281
    %v1394 = vpack.c.b16 %v1290, %v1286
    %v1395 = vpack.c.b16 %v1291, %v1287
    %v1396 = vpack.c.b16 %v1292, %v1288
    %v1397 = vpack.c.b16 %v1293, %v1289
    %v1398 = vpack.c.b16 %v1298, %v1294
    %v1399 = vpack.c.b16 %v1299, %v1295
    %v1400 = vpack.c.b16 %v1300, %v1296
    %v1401 = vpack.c.b16 %v1301, %v1297
    %v1402 = vpack.c.b16 %v1306, %v1302
    %v1403 = vpack.c.b16 %v1307, %v1303
    %v1404 = vpack.c.b16 %v1308, %v1304
    %v1405 = vpack.c.b16 %v1309, %v1305
    %v1406 = vpack.c.b16 %v1314, %v1310
    %v1407 = vpack.c.b16 %v1315, %v1311
    %v1408 = vpack.c.b16 %v1316, %v1312
    %v1409 = vpack.c.b16 %v1317, %v1313
    %v1410 = vpack.c.b16 %v1322, %v1318
    %v1411 = vpack.c.b16 %v1323, %v1319
    %v1412 = vpack.c.b16 %v1324, %v1320
    %v1413 = vpack.c.b16 %v1325, %v1321
    %v1414 = vpack.c.b16 %v1330, %v1326
    %v1415 = vpack.c.b16 %v1331, %v1327
    %v1416 = vpack.c.b16 %v1332, %v1328
    %v1417 = vpack.c.b16 %v1333, %v1329
    %v1418 = vpack.c.b16 %v1338, %v1334
    %v1419 = vpack.c.b16 %v1339, %v1335
    %v1420 = vpack.c.b16 %v1340, %v1336
    %v1421 = vpack.c.b16 %v1341, %v1337
    %v1422 = vpack.c.b16 %v1346, %v1342
    %v1423 = vpack.c.b16 %v1347, %v1343
    %v1424 = vpack.c.b16 %v1348, %v1344
    %v1425 = vpack.c.b16 %v1349, %v1345
    %v1426 = vpack.c.b16 %v1354, %v1350
    %v1427 = vpack.c.b16 %v1355, %v1351
    %v1428 = vpack.c.b16 %v1356, %v1352
    %v1429 = vpack.c.b16 %v1357, %v1353
    %v1430 = vpack.c.b16 %v1362, %v1358
    %v1431 = vpack.c.b16 %v1363, %v1359
    %v1432 = vpack.c.b16 %v1364, %v1360
    %v1433 = vpack.c.b16 %v1365, %v1361
    %v1434 = vpack.c.b16 %v1370, %v1366
    %v1435 = vpack.c.b16 %v1371, %v1367
    %v1436 = vpack.c.b16 %v1372, %v1368
    %v1437 = vpack.c.b16 %v1373, %v1369
    %1502 = vmatpush.bf16.msra.mxu0 %v1402
    %1503 = vmatpush.bf16.msra.mxu0 %v1398
    %1504 = vmatpush.bf16.msra.mxu0 %v1394
    %1505 = vmatpush.bf16.msra.mxu0 %v1390
    %1506 = vmatpush.bf16.msra.mxu0 %v1386
    %1507 = vmatpush.bf16.msra.mxu0 %v1382
    %1508 = vmatpush.bf16.msra.mxu0 %v1378
    %1509 = vmatpush.bf16.msra.mxu0 %v1374
    %1510 = vmatmul.bf16.gmra.mxu0 %v1106
    %v1511 = vpop.f32.mrf.mxu0
    %v1512 = vadd.f32 %v1174, %v1511
    %v1513 = vpop.f32.mrf.mxu0
    %1514 = vdwg.mxu0
    %1515 = vmatpush.bf16.msra.mxu0 %v1434
    %1516 = vmatpush.bf16.msra.mxu0 %v1430
    %1517 = vmatpush.bf16.msra.mxu0 %v1426
    %1518 = vmatpush.bf16.msra.mxu0 %v1422
    %1519 = vmatpush.bf16.msra.mxu0 %v1418
    %1520 = vmatpush.bf16.msra.mxu0 %v1414
    %1521 = vmatpush.bf16.msra.mxu0 %v1410
    %1522 = vmatpush.bf16.msra.mxu0 %v1406
    %1523 = vmatmul.bf16.gmra.mxu0 %v1107
    %v1524 = vpop.f32.mrf.mxu0
    %v1525 = vadd.f32 %v1512, %v1524
    %v1526 = vpop.f32.mrf.mxu0
    %1527 = vdwg.mxu0
    %1528 = vmatpush.bf16.msra.mxu0 %v1403
    %1529 = vmatpush.bf16.msra.mxu0 %v1399
    %1530 = vmatpush.bf16.msra.mxu0 %v1395
    %1531 = vmatpush.bf16.msra.mxu0 %v1391
    %1532 = vmatpush.bf16.msra.mxu0 %v1387
    %1533 = vmatpush.bf16.msra.mxu0 %v1383
    %1534 = vmatpush.bf16.msra.mxu0 %v1379
    %1535 = vmatpush.bf16.msra.mxu0 %v1375
    %1536 = vmatmul.bf16.gmra.mxu0 %v1106
    %v1537 = vpop.f32.mrf.mxu0
    %v1538 = vadd.f32 %v1175, %v1537
    %v1539 = vpop.f32.mrf.mxu0
    %1540 = vdwg.mxu0
    %1541 = vmatpush.bf16.msra.mxu0 %v1435
    %1542 = vmatpush.bf16.msra.mxu0 %v1431
    %1543 = vmatpush.bf16.msra.mxu0 %v1427
    %1544 = vmatpush.bf16.msra.mxu0 %v1423
    %1545 = vmatpush.bf16.msra.mxu0 %v1419
    %1546 = vmatpush.bf16.msra.mxu0 %v1415
    %1547 = vmatpush.bf16.msra.mxu0 %v1411
    %1548 = vmatpush.bf16.msra.mxu0 %v1407
    %1549 = vmatmul.bf16.gmra.mxu0 %v1107
    %v1550 = vpop.f32.mrf.mxu0
    %v1551 = vadd.f32 %v1538, %v1550
    %v1552 = vpop.f32.mrf.mxu0
    %1553 = vdwg.mxu0
    %1554 = vmatpush.bf16.msra.mxu0 %v1404
    %1555 = vmatpush.bf16.msra.mxu0 %v1400
    %1556 = vmatpush.bf16.msra.mxu0 %v1396
    %1557 = vmatpush.bf16.msra.mxu0 %v1392
    %1558 = vmatpush.bf16.msra.mxu0 %v1388
    %1559 = vmatpush.bf16.msra.mxu0 %v1384
    %1560 = vmatpush.bf16.msra.mxu0 %v1380
    %1561 = vmatpush.bf16.msra.mxu0 %v1376
    %1562 = vmatmul.bf16.gmra.mxu0 %v1106
    %v1563 = vpop.f32.mrf.mxu0
    %v1564 = vadd.f32 %v1176, %v1563
    %v1565 = vpop.f32.mrf.mxu0
    %1566 = vdwg.mxu0
    %1567 = vmatpush.bf16.msra.mxu0 %v1436
    %1568 = vmatpush.bf16.msra.mxu0 %v1432
    %1569 = vmatpush.bf16.msra.mxu0 %v1428
    %1570 = vmatpush.bf16.msra.mxu0 %v1424
    %1571 = vmatpush.bf16.msra.mxu0 %v1420
    %1572 = vmatpush.bf16.msra.mxu0 %v1416
    %1573 = vmatpush.bf16.msra.mxu0 %v1412
    %1574 = vmatpush.bf16.msra.mxu0 %v1408
    %1575 = vmatmul.bf16.gmra.mxu0 %v1107
    %v1576 = vpop.f32.mrf.mxu0
    %v1577 = vadd.f32 %v1564, %v1576
    %v1578 = vpop.f32.mrf.mxu0
    %1579 = vdwg.mxu0
    %1580 = vmatpush.bf16.msra.mxu0 %v1405
    %1581 = vmatpush.bf16.msra.mxu0 %v1401
    %1582 = vmatpush.bf16.msra.mxu0 %v1397
    %1583 = vmatpush.bf16.msra.mxu0 %v1393
    %1584 = vmatpush.bf16.msra.mxu0 %v1389
    %1585 = vmatpush.bf16.msra.mxu0 %v1385
    %1586 = vmatpush.bf16.msra.mxu0 %v1381
    %1587 = vmatpush.bf16.msra.mxu0 %v1377
    %1588 = vmatmul.bf16.gmra.mxu0 %v1106
    %v1589 = vpop.f32.mrf.mxu0
    %v1590 = vadd.f32 %v1177, %v1589
    %v1591 = vpop.f32.mrf.mxu0
    %1592 = vdwg.mxu0
    %1593 = vmatpush.bf16.msra.mxu0 %v1437
    %1594 = vmatpush.bf16.msra.mxu0 %v1433
    %1595 = vmatpush.bf16.msra.mxu0 %v1429
    %1596 = vmatpush.bf16.msra.mxu0 %v1425
    %1597 = vmatpush.bf16.msra.mxu0 %v1421
    %1598 = vmatpush.bf16.msra.mxu0 %v1417
    %1599 = vmatpush.bf16.msra.mxu0 %v1413
    %1600 = vmatpush.bf16.msra.mxu0 %v1409
    %1601 = vmatmul.bf16.gmra.mxu0 %v1107
    %v1602 = vpop.f32.mrf.mxu0
    %v1603 = vadd.f32 %v1590, %v1602
    %v1604 = vpop.f32.mrf.mxu0
    %1605 = vdwg.mxu0
    %v1606 = vmax.f32 %v1525, 0.0
    %v1607 = vmax.f32 %v1551, 0.0
    %v1608 = vmax.f32 %v1577, 0.0
    %v1609 = vmax.f32 %v1603, 0.0
    %v1610 = vpack.c.bf16 %v1606, %v1606
    %v1611 = vpack.c.bf16 %v1607, %v1607
    %v1612 = vpack.c.bf16 %v1608, %v1608
    %v1613 = vpack.c.bf16 %v1609, %v1609
    %v1614 = vld [vmem:[%s17] sm:$0xf]
    %v1615 = vld [vmem:[%s17 + $0x4] sm:$0xf]
    %v1616 = vld [vmem:[%s17 + $0x8] sm:$0xf]
    %v1617 = vld [vmem:[%s17 + $0xc] sm:$0xf]
    %v1618 = vld [vmem:[%s17 + $0x10] sm:$0xf]
    %v1619 = vld [vmem:[%s17 + $0x14] sm:$0xf]
    %v1620 = vld [vmem:[%s17 + $0x18] sm:$0xf]
    %v1621 = vld [vmem:[%s17 + $0x1c] sm:$0xf]
    %v1622 = vld [vmem:[%s17 + $0x20] sm:$0xf]
    %v1623 = vld [vmem:[%s17 + $0x24] sm:$0xf]
    %v1624 = vld [vmem:[%s17 + $0x28] sm:$0xf]
    %v1625 = vld [vmem:[%s17 + $0x2c] sm:$0xf]
    %v1626 = vld [vmem:[%s17 + $0x30] sm:$0xf]
    %v1627 = vld [vmem:[%s17 + $0x34] sm:$0xf]
    %v1628 = vld [vmem:[%s17 + $0x38] sm:$0xf]
    %v1629 = vld [vmem:[%s17 + $0x3c] sm:$0xf]
    %v1630 = vld [vmem:[%s17 + $0x40] sm:$0xf]
    %v1631 = vld [vmem:[%s17 + $0x44] sm:$0xf]
    %v1632 = vld [vmem:[%s17 + $0x48] sm:$0xf]
    %v1633 = vld [vmem:[%s17 + $0x4c] sm:$0xf]
    %v1634 = vld [vmem:[%s17 + $0x50] sm:$0xf]
    %v1635 = vld [vmem:[%s17 + $0x54] sm:$0xf]
    %v1636 = vld [vmem:[%s17 + $0x58] sm:$0xf]
    %v1637 = vld [vmem:[%s17 + $0x5c] sm:$0xf]
    %v1638 = vld [vmem:[%s17 + $0x60] sm:$0xf]
    %v1639 = vld [vmem:[%s17 + $0x64] sm:$0xf]
    %v1640 = vld [vmem:[%s17 + $0x68] sm:$0xf]
    %v1641 = vld [vmem:[%s17 + $0x6c] sm:$0xf]
    %v1642 = vld [vmem:[%s17 + $0x70] sm:$0xf]
    %v1643 = vld [vmem:[%s17 + $0x74] sm:$0xf]
    %v1644 = vld [vmem:[%s17 + $0x78] sm:$0xf]
    %v1645 = vld [vmem:[%s17 + $0x7c] sm:$0xf]
    %v1646 = vld [vmem:[%s17 + $0x80] sm:$0xf]
    %v1647 = vld [vmem:[%s17 + $0x84] sm:$0xf]
    %v1648 = vld [vmem:[%s17 + $0x88] sm:$0xf]
    %v1649 = vld [vmem:[%s17 + $0x8c] sm:$0xf]
    %v1650 = vld [vmem:[%s17 + $0x90] sm:$0xf]
    %v1651 = vld [vmem:[%s17 + $0x94] sm:$0xf]
    %v1652 = vld [vmem:[%s17 + $0x98] sm:$0xf]
    %v1653 = vld [vmem:[%s17 + $0x9c] sm:$0xf]
    %v1654 = vld [vmem:[%s17 + $0xa0] sm:$0xf]
    %v1655 = vld [vmem:[%s17 + $0xa4] sm:$0xf]
    %v1656 = vld [vmem:[%s17 + $0xa8] sm:$0xf]
    %v1657 = vld [vmem:[%s17 + $0xac] sm:$0xf]
    %v1658 = vld [vmem:[%s17 + $0xb0] sm:$0xf]
    %v1659 = vld [vmem:[%s17 + $0xb4] sm:$0xf]
    %v1660 = vld [vmem:[%s17 + $0xb8] sm:$0xf]
    %v1661 = vld [vmem:[%s17 + $0xbc] sm:$0xf]
    %v1662 = vld [vmem:[%s17 + $0xc0] sm:$0xf]
    %v1663 = vld [vmem:[%s17 + $0xc4] sm:$0xf]
    %v1664 = vld [vmem:[%s17 + $0xc8] sm:$0xf]
    %v1665 = vld [vmem:[%s17 + $0xcc] sm:$0xf]
    %v1666 = vld [vmem:[%s17 + $0xd0] sm:$0xf]
    %v1667 = vld [vmem:[%s17 + $0xd4] sm:$0xf]
    %v1668 = vld [vmem:[%s17 + $0xd8] sm:$0xf]
    %v1669 = vld [vmem:[%s17 + $0xdc] sm:$0xf]
    %v1670 = vld [vmem:[%s17 + $0xe0] sm:$0xf]
    %v1671 = vld [vmem:[%s17 + $0xe4] sm:$0xf]
    %v1672 = vld [vmem:[%s17 + $0xe8] sm:$0xf]
    %v1673 = vld [vmem:[%s17 + $0xec] sm:$0xf]
    %v1674 = vld [vmem:[%s17 + $0xf0] sm:$0xf]
    %v1675 = vld [vmem:[%s17 + $0xf4] sm:$0xf]
    %v1676 = vld [vmem:[%s17 + $0xf8] sm:$0xf]
    %v1677 = vld [vmem:[%s17 + $0xfc] sm:$0xf]
    %v1678 = vld [vmem:[%s18] sm:$0x1]
    %v1680 = vperm.slane %v1678, 0
    %v1746 = vunpack.c.l.b16 %v1614
    %v1747 = vunpack.c.l.b16 %v1615
    %v1748 = vunpack.c.l.b16 %v1616
    %v1749 = vunpack.c.l.b16 %v1617
    %v1750 = vunpack.c.l.b16 %v1618
    %v1751 = vunpack.c.l.b16 %v1619
    %v1752 = vunpack.c.l.b16 %v1620
    %v1753 = vunpack.c.l.b16 %v1621
    %v1754 = vunpack.c.l.b16 %v1622
    %v1755 = vunpack.c.l.b16 %v1623
    %v1756 = vunpack.c.l.b16 %v1624
    %v1757 = vunpack.c.l.b16 %v1625
    %v1758 = vunpack.c.l.b16 %v1626
    %v1759 = vunpack.c.l.b16 %v1627
    %v1760 = vunpack.c.l.b16 %v1628
    %v1761 = vunpack.c.l.b16 %v1629
    %v1762 = vunpack.c.l.b16 %v1630
    %v1763 = vunpack.c.l.b16 %v1631
    %v1764 = vunpack.c.l.b16 %v1632
    %v1765 = vunpack.c.l.b16 %v1633
    %v1766 = vunpack.c.l.b16 %v1634
    %v1767 = vunpack.c.l.b16 %v1635
    %v1768 = vunpack.c.l.b16 %v1636
    %v1769 = vunpack.c.l.b16 %v1637
    %v1770 = vunpack.c.l.b16 %v1638
    %v1771 = vunpack.c.l.b16 %v1639
    %v1772 = vunpack.c.l.b16 %v1640
    %v1773 = vunpack.c.l.b16 %v1641
    %v1774 = vunpack.c.l.b16 %v1642
    %v1775 = vunpack.c.l.b16 %v1643
    %v1776 = vunpack.c.l.b16 %v1644
    %v1777 = vunpack.c.l.b16 %v1645
    %v1778 = vunpack.c.l.b16 %v1646
    %v1779 = vunpack.c.l.b16 %v1647
    %v1780 = vunpack.c.l.b16 %v1648
    %v1781 = vunpack.c.l.b16 %v1649
    %v1782 = vunpack.c.l.b16 %v1650
    %v1783 = vunpack.c.l.b16 %v1651
    %v1784 = vunpack.c.l.b16 %v1652
    %v1785 = vunpack.c.l.b16 %v1653
    %v1786 = vunpack.c.l.b16 %v1654
    %v1787 = vunpack.c.l.b16 %v1655
    %v1788 = vunpack.c.l.b16 %v1656
    %v1789 = vunpack.c.l.b16 %v1657
    %v1790 = vunpack.c.l.b16 %v1658
    %v1791 = vunpack.c.l.b16 %v1659
    %v1792 = vunpack.c.l.b16 %v1660
    %v1793 = vunpack.c.l.b16 %v1661
    %v1794 = vunpack.c.l.b16 %v1662
    %v1795 = vunpack.c.l.b16 %v1663
    %v1796 = vunpack.c.l.b16 %v1664
    %v1797 = vunpack.c.l.b16 %v1665
    %v1798 = vunpack.c.l.b16 %v1666
    %v1799 = vunpack.c.l.b16 %v1667
    %v1800 = vunpack.c.l.b16 %v1668
    %v1801 = vunpack.c.l.b16 %v1669
    %v1802 = vunpack.c.l.b16 %v1670
    %v1803 = vunpack.c.l.b16 %v1671
    %v1804 = vunpack.c.l.b16 %v1672
    %v1805 = vunpack.c.l.b16 %v1673
    %v1806 = vunpack.c.l.b16 %v1674
    %v1807 = vunpack.c.l.b16 %v1675
    %v1808 = vunpack.c.l.b16 %v1676
    %v1809 = vunpack.c.l.b16 %v1677
    %v1810 = vpack.c.b16 %v1747, %v1746
    %v1811 = vpack.c.b16 %v1749, %v1748
    %v1812 = vpack.c.b16 %v1751, %v1750
    %v1813 = vpack.c.b16 %v1753, %v1752
    %v1814 = vpack.c.b16 %v1755, %v1754
    %v1815 = vpack.c.b16 %v1757, %v1756
    %v1816 = vpack.c.b16 %v1759, %v1758
    %v1817 = vpack.c.b16 %v1761, %v1760
    %v1818 = vpack.c.b16 %v1763, %v1762
    %v1819 = vpack.c.b16 %v1765, %v1764
    %v1820 = vpack.c.b16 %v1767, %v1766
    %v1821 = vpack.c.b16 %v1769, %v1768
    %v1822 = vpack.c.b16 %v1771, %v1770
    %v1823 = vpack.c.b16 %v1773, %v1772
    %v1824 = vpack.c.b16 %v1775, %v1774
    %v1825 = vpack.c.b16 %v1777, %v1776
    %v1826 = vpack.c.b16 %v1779, %v1778
    %v1827 = vpack.c.b16 %v1781, %v1780
    %v1828 = vpack.c.b16 %v1783, %v1782
    %v1829 = vpack.c.b16 %v1785, %v1784
    %v1830 = vpack.c.b16 %v1787, %v1786
    %v1831 = vpack.c.b16 %v1789, %v1788
    %v1832 = vpack.c.b16 %v1791, %v1790
    %v1833 = vpack.c.b16 %v1793, %v1792
    %v1834 = vpack.c.b16 %v1795, %v1794
    %v1835 = vpack.c.b16 %v1797, %v1796
    %v1836 = vpack.c.b16 %v1799, %v1798
    %v1837 = vpack.c.b16 %v1801, %v1800
    %v1838 = vpack.c.b16 %v1803, %v1802
    %v1839 = vpack.c.b16 %v1805, %v1804
    %v1840 = vpack.c.b16 %v1807, %v1806
    %v1841 = vpack.c.b16 %v1809, %v1808
    %1874 = vmatpush.bf16.msra.mxu0 %v1817
    %1875 = vmatpush.bf16.msra.mxu0 %v1816
    %1876 = vmatpush.bf16.msra.mxu0 %v1815
    %1877 = vmatpush.bf16.msra.mxu0 %v1814
    %1878 = vmatpush.bf16.msra.mxu0 %v1813
    %1879 = vmatpush.bf16.msra.mxu0 %v1812
    %1880 = vmatpush.bf16.msra.mxu0 %v1811
    %1881 = vmatpush.bf16.msra.mxu0 %v1810
    %1882 = vmatmul.bf16.gmra.mxu0 %v1610
    %v1883 = vpop.f32.mrf.mxu0
    %v1884 = vadd.f32 %v1680, %v1883
    %v1885 = vpop.f32.mrf.mxu0
    %1886 = vdwg.mxu0
    %1887 = vmatpush.bf16.msra.mxu0 %v1825
    %1888 = vmatpush.bf16.msra.mxu0 %v1824
    %1889 = vmatpush.bf16.msra.mxu0 %v1823
    %1890 = vmatpush.bf16.msra.mxu0 %v1822
    %1891 = vmatpush.bf16.msra.mxu0 %v1821
    %1892 = vmatpush.bf16.msra.mxu0 %v1820
    %1893 = vmatpush.bf16.msra.mxu0 %v1819
    %1894 = vmatpush.bf16.msra.mxu0 %v1818
    %1895 = vmatmul.bf16.gmra.mxu0 %v1611
    %v1896 = vpop.f32.mrf.mxu0
    %v1897 = vadd.f32 %v1884, %v1896
    %v1898 = vpop.f32.mrf.mxu0
    %1899 = vdwg.mxu0
    %1900 = vmatpush.bf16.msra.mxu0 %v1833
    %1901 = vmatpush.bf16.msra.mxu0 %v1832
    %1902 = vmatpush.bf16.msra.mxu0 %v1831
    %1903 = vmatpush.bf16.msra.mxu0 %v1830
    %1904 = vmatpush.bf16.msra.mxu0 %v1829
    %1905 = vmatpush.bf16.msra.mxu0 %v1828
    %1906 = vmatpush.bf16.msra.mxu0 %v1827
    %1907 = vmatpush.bf16.msra.mxu0 %v1826
    %1908 = vmatmul.bf16.gmra.mxu0 %v1612
    %v1909 = vpop.f32.mrf.mxu0
    %v1910 = vadd.f32 %v1897, %v1909
    %v1911 = vpop.f32.mrf.mxu0
    %1912 = vdwg.mxu0
    %1913 = vmatpush.bf16.msra.mxu0 %v1841
    %1914 = vmatpush.bf16.msra.mxu0 %v1840
    %1915 = vmatpush.bf16.msra.mxu0 %v1839
    %1916 = vmatpush.bf16.msra.mxu0 %v1838
    %1917 = vmatpush.bf16.msra.mxu0 %v1837
    %1918 = vmatpush.bf16.msra.mxu0 %v1836
    %1919 = vmatpush.bf16.msra.mxu0 %v1835
    %1920 = vmatpush.bf16.msra.mxu0 %v1834
    %1921 = vmatmul.bf16.gmra.mxu0 %v1613
    %v1922 = vpop.f32.mrf.mxu0
    %v1923 = vadd.f32 %v1910, %v1922
    %v1924 = vpop.f32.mrf.mxu0
    %1925 = vdwg.mxu0
    %v1926 = vand.u32 2147483647, %v1923
    %v1927 = vsub.f32 0.0, %v1926
    %v1928 = vmul.f32 %v1927, 1.442695
    %v1929 = vpow.pop %v1928
    %v1930 = vadd.f32 %v1929, 1.0
    %v1931 = vrcp.pop %v1930
    %vm1932 = vcmp.ge.f32.partialorder %v1923, 0.0
    %v1933 = vmul.f32 %v1929, %v1931
    %v1934 = vsel %vm1932, %v1931, %v1933
    %1935 = vst.msk [vmem:[%s19] sm:$0xff] %vm203, %v1934
    // Predicated region
    $region86: #{forward.1} parent=1 // pred_check
      _
    $region87: #{forward.1} parent=1 // pred_check_branch
      %1937 = sbr.rel (0) target = $region89
    $region88: #{forward.1} parent=1 // pred_region
      _
    $region89: #{forward.1} parent=1 // pred_fallthru
      _
    // Predicated region
    $region90: #{forward.1} parent=1 // pred_check
      _
    $region91: #{forward.1} parent=1 // pred_check_branch
      %1939 = sbr.rel (0) target = $region93
    $region92: #{forward.1} parent=1 // pred_region
      _
    $region93: #{forward.1} parent=1 // pred_fallthru
      _
    %1940 = vsyncpa [#allocation3], 1
    %1941 = vsyncpa [#allocation5], 1

</llo_original>
